<compile_context>
chip_gen: v6e
topology: v6e:2x2x1
jax: 0.10.0
libtpu: 0.0.40
codegen_flags: <defaults>
</compile_context>

<pallas_src>
import jax
import jax.numpy as jnp
from jax.experimental import pallas as pl
from jax.experimental.pallas import tpu as pltpu

# ---- model hyper-parameters (match the PyTorch module) ----------------------
NUM_LOC_EMBEDDINGS = 10
NUM_LOCS = 28
NUM_TIME_EMBEDDINGS = 10
NUM_TIMES = 48
HIDDEN_DIM = 32
OUTPUT_DIM = 16
LSTM_LAYERS = 2                                   # fixed at 2, as in the module
D_IN = NUM_LOC_EMBEDDINGS + NUM_TIME_EMBEDDINGS   # 20
GATES = 4 * HIDDEN_DIM                            # 128 lanes = one full vreg width


def _round8(n):
    return ((n + 7) // 8) * 8


# ---- weight-slab row offsets (all sections 8-row aligned) --------------------
TL_OFF = 0                                        # loc table    [28, 4H] (pad to 32)
TT_OFF = TL_OFF + _round8(NUM_LOCS)               # time table   [48, 4H]
WHH0_OFF = TT_OFF + _round8(NUM_TIMES)            # W_hh0        [H, 4H]
WIH1_OFF = WHH0_OFF + HIDDEN_DIM                  # W_ih1        [H, 4H]
WHH1_OFF = WIH1_OFF + HIDDEN_DIM                  # W_hh1        [H, 4H]
B1_OFF = WHH1_OFF + HIDDEN_DIM                    # b1           [1, 4H]  (pad to 8)
WFC_OFF = B1_OFF + 8                              # W_fc padded  [H, 4H]
BFC_OFF = WFC_OFF + HIDDEN_DIM                    # b_fc padded  [1, 4H]  (pad to 8)
SLAB_ROWS = BFC_OFF + 8                           # 224 rows x 128 lanes f32 (112 KiB)


# ---- Pallas kernel: gather -> 2-layer LSTM over time -> final FC -------------
def lstm_fc_kernel(idx_ref,        # SMEM int32 [2, B*T]  (row 0 = loc, row 1 = time)
                   slab_ref,       # VMEM f32   [SLAB_ROWS, 4H] packed weights/tables
                   out_ref):       # VMEM f32   [B, O]
    B, O = out_ref.shape
    G = slab_ref.shape[1]          # 4H
    H = G // 4
    T = idx_ref.shape[1] // B
    Bp = _round8(B)                # pad batch (as values only) to a full sublane group
    f32 = jnp.float32

    # ---- loop-invariant weights, held in vregs --------------------------------
    whh0 = slab_ref[WHH0_OFF:WHH0_OFF + H, :]               # [H, 4H]
    wih1 = slab_ref[WIH1_OFF:WIH1_OFF + H, :]               # [H, 4H]
    whh1 = slab_ref[WHH1_OFF:WHH1_OFF + H, :]               # [H, 4H]
    b1_b = jnp.broadcast_to(slab_ref[B1_OFF:B1_OFF + 1, :], (Bp, G))  # hoisted bcast

    # ---- per-lane constants for the single-tanh gate trick (hoisted) ----------
    # sigmoid(x) = 0.5*tanh(0.5*x) + 0.5 ; PyTorch gate order i, f, g, o
    lane = jax.lax.broadcasted_iota(jnp.int32, (Bp, G), 1)
    is_g = jnp.logical_and(lane >= 2 * H, lane < 3 * H)
    scale = jnp.where(is_g, f32(1.0), f32(0.5))             # pre- and post-scale
    offset = jnp.where(is_g, f32(0.0), f32(0.5))            # post-offset

    def gate_math(gates, c_prev):
        t = jnp.tanh(gates * scale)                         # one EUP push for all gates
        u = t * scale + offset                              # sigmoid(i,f,o) / tanh(g)
        i = u[:, 0 * H:1 * H]
        f = u[:, 1 * H:2 * H]
        g = u[:, 2 * H:3 * H]
        o = u[:, 3 * H:4 * H]
        c_new = f * c_prev + i * g
        h_new = o * jnp.tanh(c_new)
        return h_new, c_new

    # ---- layer-0 input projection: gathered from the fused embedding tables ---
    pad_rows = jnp.zeros((Bp - B, G), f32) if Bp > B else None   # hoisted

    def gx0(t):
        rows = []
        for b in range(B):
            li = idx_ref[0, b * T + t]                      # SMEM scalar reads
            ti = idx_ref[1, b * T + t]
            rows.append(slab_ref[pl.ds(TL_OFF + li, 1), :] +
                        slab_ref[pl.ds(TT_OFF + ti, 1), :])  # [1, 4H]  (b0 folded in)
        if pad_rows is not None:
            rows.append(pad_rows)
        return jnp.concatenate(rows, axis=0) if len(rows) > 1 else rows[0]

    zeros = jnp.zeros((Bp, H), f32)
    h0 = c0 = zeros
    h1 = c1 = zeros
    hh1 = b1_b                      # h1_{-1} @ W_hh1 + b1  with  h1_{-1} = 0

    # ---- fully unrolled recurrence (T is small & static) -----------------------
    for t in range(T):
        # layer 0: W_ih0 projection + b0 already live inside the gathered rows
        gates0 = gx0(t)
        if t > 0:                   # h0 == 0 at t == 0, skip the dead matmul
            gates0 = gates0 + jnp.dot(h0, whh0, preferred_element_type=f32)
        h0, c0 = gate_math(gates0, c0)

        # layer 1: only the K=H W_ih1 push is on the critical path; the W_hh1
        # half (+ b1) was computed right after the previous step's h1 (off-path).
        gates1 = jnp.dot(h0, wih1, preferred_element_type=f32) + hh1
        h1, c1 = gate_math(gates1, c1)
        if t + 1 < T:
            hh1 = jnp.dot(h1, whh1, preferred_element_type=f32) + b1_b

    # ---- final FC on the last-step hidden of the top layer ---------------------
    wfc = slab_ref[WFC_OFF:WFC_OFF + H, :]                  # [H, 4H], zero past col O
    bfc = slab_ref[BFC_OFF:BFC_OFF + 1, :]
    fc = jnp.dot(h1, wfc, preferred_element_type=f32) + bfc
    out_ref[...] = fc[:B, :O]


# ---- parameter init (mirrors the PyTorch module's shapes/semantics) ----------
def init_params(key, hidden_dim=HIDDEN_DIM, output_dim=OUTPUT_DIM):
    ks = jax.random.split(key, 12)
    s = 1.0 / jnp.sqrt(hidden_dim)

    def u(k, shape, scale):
        return jax.random.uniform(k, shape, jnp.float32, -scale, scale)

    return {
        "loc_emb":  jax.random.normal(ks[0], (NUM_LOCS, NUM_LOC_EMBEDDINGS), jnp.float32),
        "time_emb": jax.random.normal(ks[1], (NUM_TIMES, NUM_TIME_EMBEDDINGS), jnp.float32),
        # layer 0 (input size D_IN), stored transposed for x @ W; gate order (i,f,g,o)
        "w_ih0": u(ks[2], (D_IN, 4 * hidden_dim), s),
        "w_hh0": u(ks[3], (hidden_dim, 4 * hidden_dim), s),
        "b0":    u(ks[4], (1, 4 * hidden_dim), s) + u(ks[5], (1, 4 * hidden_dim), s),
        # layer 1 (input size hidden_dim)
        "w_ih1": u(ks[6], (hidden_dim, 4 * hidden_dim), s),
        "w_hh1": u(ks[7], (hidden_dim, 4 * hidden_dim), s),
        "b1":    u(ks[8], (1, 4 * hidden_dim), s) + u(ks[9], (1, 4 * hidden_dim), s),
        # final linear
        "w_fc":  u(ks[10], (hidden_dim, output_dim), s),
        "b_fc":  u(ks[11], (1, output_dim), s),
    }


# ---- one-time packing: fold embeddings through W_ih0/b0 and build the slab ----
def pack_params(params):
    H = HIDDEN_DIM
    G = 4 * H
    tl = params["loc_emb"] @ params["w_ih0"][:NUM_LOC_EMBEDDINGS]                   # [28, 4H]
    tt = params["time_emb"] @ params["w_ih0"][NUM_LOC_EMBEDDINGS:] + params["b0"]   # [48, 4H]
    wfc = jnp.zeros((H, G), jnp.float32).at[:, :OUTPUT_DIM].set(params["w_fc"])
    bfc = jnp.zeros((1, G), jnp.float32).at[:, :OUTPUT_DIM].set(params["b_fc"])

    slab = jnp.zeros((SLAB_ROWS, G), jnp.float32)
    slab = slab.at[TL_OFF:TL_OFF + NUM_LOCS].set(tl)
    slab = slab.at[TT_OFF:TT_OFF + NUM_TIMES].set(tt)
    slab = slab.at[WHH0_OFF:WHH0_OFF + H].set(params["w_hh0"])
    slab = slab.at[WIH1_OFF:WIH1_OFF + H].set(params["w_ih1"])
    slab = slab.at[WHH1_OFF:WHH1_OFF + H].set(params["w_hh1"])
    slab = slab.at[B1_OFF:B1_OFF + 1].set(params["b1"])
    slab = slab.at[WFC_OFF:WFC_OFF + H].set(wfc)
    slab = slab.at[BFC_OFF:BFC_OFF + 1].set(bfc)
    return slab


# ---- wrapper: one grid-less pallas_call, no XLA glue beyond a 128-byte reshape
@jax.jit
def model_forward(x, slab):
    # x: int32 [2, B, T] ; x[0] = loc indices, x[1] = time indices (as in PyTorch)
    _, B, T = x.shape
    idx = x.reshape(2, B * T).astype(jnp.int32)     # contiguous reshape (no data move)
    return pl.pallas_call(
        lstm_fc_kernel,
        out_shape=jax.ShapeDtypeStruct((B, OUTPUT_DIM), jnp.float32),
        in_specs=[pl.BlockSpec(memory_space=pltpu.MemorySpace.SMEM),   # indices
                  pl.BlockSpec(memory_space=pltpu.MemorySpace.VMEM)],  # weight slab
        out_specs=pl.BlockSpec(memory_space=pltpu.MemorySpace.VMEM),
    )(idx, slab)


# ---- pure-JAX reference (mirrors the PyTorch forward) -------------------------
def reference_forward(x, params):
    loc, tim = x[0], x[1]
    emb1 = params["loc_emb"][loc]                       # [B, T, 10]
    emb2 = params["time_emb"][tim]                      # [B, T, 10]
    xt = jnp.concatenate([emb1, emb2], axis=2)          # [B, T, 20]
    B, T, _ = xt.shape
    H = HIDDEN_DIM

    def cell(x_t, h, c, w_ih, w_hh, b):
        gates = x_t @ w_ih + h @ w_hh + b
        i = jax.nn.sigmoid(gates[:, 0 * H:1 * H])
        f = jax.nn.sigmoid(gates[:, 1 * H:2 * H])
        g = jnp.tanh(gates[:, 2 * H:3 * H])
        o = jax.nn.sigmoid(gates[:, 3 * H:4 * H])
        c = f * c + i * g
        h = o * jnp.tanh(c)
        return h, c

    h0 = c0 = h1 = c1 = jnp.zeros((B, H), jnp.float32)
    for t in range(T):
        h0, c0 = cell(xt[:, t], h0, c0, params["w_ih0"], params["w_hh0"], params["b0"])
        h1, c1 = cell(h0, h1, c1, params["w_ih1"], params["w_hh1"], params["b1"])
    return h1 @ params["w_fc"] + params["b_fc"]


if __name__ == "__main__":
    key = jax.random.PRNGKey(0)
    pkey, lkey, tkey = jax.random.split(key, 3)

    B, T = 2, 8
    params = init_params(pkey)
    slab = pack_params(params)          # done once at init, outside the per-call path

    loc = jax.random.randint(lkey, (B, T), 0, NUM_LOCS, dtype=jnp.int32)
    tim = jax.random.randint(tkey, (B, T), 0, NUM_TIMES, dtype=jnp.int32)
    x = jnp.stack([loc, tim], axis=0)   # [2, B, T], like `x` in the torch forward

    out = model_forward(x, slab)
    jax.block_until_ready(out)
    assert out.shape == (B, OUTPUT_DIM)

    ref = reference_forward(x, params)
    err = float(jnp.max(jnp.abs(out - ref)))
    assert err < 1e-3, f"mismatch vs reference: max abs err = {err}"
    print("KERNEL_OK")
</pallas_src>

<mosaic_0001>
module attributes {stable_mosaic.version = 11 : i64} {
  func.func @lstm_fc_kernel(%arg0: memref<2x16xi32, #tpu.memory_space<smem>>, %arg1: memref<224x128xf32, #tpu.memory_space<vmem>>, %arg2: memref<2x16xf32, #tpu.memory_space<vmem>>) attributes {dimension_semantics = [], scalar_prefetch = 0 : i64, scratch_operands = 0 : i64, tpu.core_type = #tpu.core_type<tc>} {
    %c80 = arith.constant 80 : index
    %c0 = arith.constant 0 : index
    %0 = vector.load %arg1[%c80, %c0] : memref<224x128xf32, #tpu.memory_space<vmem>>, vector<32x128xf32>
    %c112 = arith.constant 112 : index
    %c0_0 = arith.constant 0 : index
    %1 = vector.load %arg1[%c112, %c0_0] : memref<224x128xf32, #tpu.memory_space<vmem>>, vector<32x128xf32>
    %c144 = arith.constant 144 : index
    %c0_1 = arith.constant 0 : index
    %2 = vector.load %arg1[%c144, %c0_1] : memref<224x128xf32, #tpu.memory_space<vmem>>, vector<32x128xf32>
    %c176 = arith.constant 176 : index
    %c0_2 = arith.constant 0 : index
    %3 = vector.load %arg1[%c176, %c0_2] : memref<224x128xf32, #tpu.memory_space<vmem>>, vector<1x128xf32>
    %4 = vector.shape_cast %3 : vector<1x128xf32> to vector<1x128xf32>
    %5 = vector.broadcast %4 : vector<1x128xf32> to vector<8x128xf32>
    %6 = tpu.iota {dimensions = array<i32: 1>} : vector<8x128xi32>
    %c64_i32 = arith.constant 64 : i32
    %7 = vector.broadcast %c64_i32 : i32 to vector<8x128xi32>
    %8 = arith.cmpi sge, %6, %7 : vector<8x128xi32>
    %c96_i32 = arith.constant 96 : i32
    %9 = vector.broadcast %c96_i32 : i32 to vector<8x128xi32>
    %10 = arith.cmpi slt, %6, %9 : vector<8x128xi32>
    %11 = arith.andi %8, %10 : vector<8x128xi1>
    %cst = arith.constant 1.000000e+00 : f32
    %cst_3 = arith.constant 5.000000e-01 : f32
    %12 = vector.broadcast %cst : f32 to vector<8x128xf32>
    %13 = vector.broadcast %cst_3 : f32 to vector<8x128xf32>
    %14 = arith.select %11, %12, %13 : vector<8x128xi1>, vector<8x128xf32>
    %cst_4 = arith.constant 0.000000e+00 : f32
    %cst_5 = arith.constant 5.000000e-01 : f32
    %15 = vector.broadcast %cst_4 : f32 to vector<8x128xf32>
    %16 = vector.broadcast %cst_5 : f32 to vector<8x128xf32>
    %17 = arith.select %11, %15, %16 : vector<8x128xi1>, vector<8x128xf32>
    %cst_6 = arith.constant 0.000000e+00 : f32
    %18 = vector.broadcast %cst_6 : f32 to vector<6x128xf32>
    %cst_7 = arith.constant 0.000000e+00 : f32
    %19 = vector.broadcast %cst_7 : f32 to vector<8x32xf32>
    %c0_8 = arith.constant 0 : index
    %c0_9 = arith.constant 0 : index
    %20 = memref.load %arg0[%c0_8, %c0_9] : memref<2x16xi32, #tpu.memory_space<smem>>
    %c1 = arith.constant 1 : index
    %c0_10 = arith.constant 0 : index
    %21 = memref.load %arg0[%c1, %c0_10] : memref<2x16xi32, #tpu.memory_space<smem>>
    %c0_i32 = arith.constant 0 : i32
    %22 = arith.addi %c0_i32, %20 : i32
    %23 = arith.index_cast %22 : i32 to index
    %c0_11 = arith.constant 0 : index
    %24 = vector.load %arg1[%23, %c0_11] : memref<224x128xf32, #tpu.memory_space<vmem>>, vector<1x128xf32>
    %c32_i32 = arith.constant 32 : i32
    %25 = arith.addi %c32_i32, %21 : i32
    %26 = arith.index_cast %25 : i32 to index
    %c0_12 = arith.constant 0 : index
    %27 = vector.load %arg1[%26, %c0_12] : memref<224x128xf32, #tpu.memory_space<vmem>>, vector<1x128xf32>
    %28 = arith.addf %24, %27 : vector<1x128xf32>
    %c0_13 = arith.constant 0 : index
    %c8 = arith.constant 8 : index
    %29 = memref.load %arg0[%c0_13, %c8] : memref<2x16xi32, #tpu.memory_space<smem>>
    %c1_14 = arith.constant 1 : index
    %c8_15 = arith.constant 8 : index
    %30 = memref.load %arg0[%c1_14, %c8_15] : memref<2x16xi32, #tpu.memory_space<smem>>
    %c0_i32_16 = arith.constant 0 : i32
    %31 = arith.addi %c0_i32_16, %29 : i32
    %32 = arith.index_cast %31 : i32 to index
    %c0_17 = arith.constant 0 : index
    %33 = vector.load %arg1[%32, %c0_17] : memref<224x128xf32, #tpu.memory_space<vmem>>, vector<1x128xf32>
    %c32_i32_18 = arith.constant 32 : i32
    %34 = arith.addi %c32_i32_18, %30 : i32
    %35 = arith.index_cast %34 : i32 to index
    %c0_19 = arith.constant 0 : index
    %36 = vector.load %arg1[%35, %c0_19] : memref<224x128xf32, #tpu.memory_space<vmem>>, vector<1x128xf32>
    %37 = arith.addf %33, %36 : vector<1x128xf32>
    %38 = tpu.concatenate %28, %37, %18 in 0 : vector<1x128xf32>, vector<1x128xf32>, vector<6x128xf32> -> vector<8x128xf32>
    %39 = arith.mulf %38, %14 : vector<8x128xf32>
    %40 = math.tanh %39 : vector<8x128xf32>
    %41 = arith.mulf %40, %14 : vector<8x128xf32>
    %42 = arith.addf %41, %17 : vector<8x128xf32>
    %43 = vector.extract_strided_slice %42 {offsets = [0, 0], sizes = [8, 32], strides = [1, 1]} : vector<8x128xf32> to vector<8x32xf32>
    %44 = vector.extract_strided_slice %42 {offsets = [0, 32], sizes = [8, 32], strides = [1, 1]} : vector<8x128xf32> to vector<8x32xf32>
    %45 = vector.extract_strided_slice %42 {offsets = [0, 64], sizes = [8, 32], strides = [1, 1]} : vector<8x128xf32> to vector<8x32xf32>
    %46 = vector.extract_strided_slice %42 {offsets = [0, 96], sizes = [8, 32], strides = [1, 1]} : vector<8x128xf32> to vector<8x32xf32>
    %47 = arith.mulf %44, %19 : vector<8x32xf32>
    %48 = arith.mulf %43, %45 : vector<8x32xf32>
    %49 = arith.addf %47, %48 : vector<8x32xf32>
    %50 = math.tanh %49 : vector<8x32xf32>
    %51 = arith.mulf %46, %50 : vector<8x32xf32>
    %cst_20 = arith.constant dense<0.000000e+00> : vector<8x128xf32>
    %52 = tpu.matmul %51, %1, %cst_20 {dimension_numbers = #tpu.dot_dimension_numbers<[1], [0], [0], [1], [0, 0, 1, 1], [], []>} : vector<8x32xf32>, vector<32x128xf32>, vector<8x128xf32> -> vector<8x128xf32>
    %53 = arith.addf %52, %5 : vector<8x128xf32>
    %54 = arith.mulf %53, %14 : vector<8x128xf32>
    %55 = math.tanh %54 : vector<8x128xf32>
    %56 = arith.mulf %55, %14 : vector<8x128xf32>
    %57 = arith.addf %56, %17 : vector<8x128xf32>
    %58 = vector.extract_strided_slice %57 {offsets = [0, 0], sizes = [8, 32], strides = [1, 1]} : vector<8x128xf32> to vector<8x32xf32>
    %59 = vector.extract_strided_slice %57 {offsets = [0, 32], sizes = [8, 32], strides = [1, 1]} : vector<8x128xf32> to vector<8x32xf32>
    %60 = vector.extract_strided_slice %57 {offsets = [0, 64], sizes = [8, 32], strides = [1, 1]} : vector<8x128xf32> to vector<8x32xf32>
    %61 = vector.extract_strided_slice %57 {offsets = [0, 96], sizes = [8, 32], strides = [1, 1]} : vector<8x128xf32> to vector<8x32xf32>
    %62 = arith.mulf %59, %19 : vector<8x32xf32>
    %63 = arith.mulf %58, %60 : vector<8x32xf32>
    %64 = arith.addf %62, %63 : vector<8x32xf32>
    %65 = math.tanh %64 : vector<8x32xf32>
    %66 = arith.mulf %61, %65 : vector<8x32xf32>
    %cst_21 = arith.constant dense<0.000000e+00> : vector<8x128xf32>
    %67 = tpu.matmul %66, %2, %cst_21 {dimension_numbers = #tpu.dot_dimension_numbers<[1], [0], [0], [1], [0, 0, 1, 1], [], []>} : vector<8x32xf32>, vector<32x128xf32>, vector<8x128xf32> -> vector<8x128xf32>
    %68 = arith.addf %67, %5 : vector<8x128xf32>
    %c0_22 = arith.constant 0 : index
    %c1_23 = arith.constant 1 : index
    %69 = memref.load %arg0[%c0_22, %c1_23] : memref<2x16xi32, #tpu.memory_space<smem>>
    %c1_24 = arith.constant 1 : index
    %c1_25 = arith.constant 1 : index
    %70 = memref.load %arg0[%c1_24, %c1_25] : memref<2x16xi32, #tpu.memory_space<smem>>
    %c0_i32_26 = arith.constant 0 : i32
    %71 = arith.addi %c0_i32_26, %69 : i32
    %72 = arith.index_cast %71 : i32 to index
    %c0_27 = arith.constant 0 : index
    %73 = vector.load %arg1[%72, %c0_27] : memref<224x128xf32, #tpu.memory_space<vmem>>, vector<1x128xf32>
    %c32_i32_28 = arith.constant 32 : i32
    %74 = arith.addi %c32_i32_28, %70 : i32
    %75 = arith.index_cast %74 : i32 to index
    %c0_29 = arith.constant 0 : index
    %76 = vector.load %arg1[%75, %c0_29] : memref<224x128xf32, #tpu.memory_space<vmem>>, vector<1x128xf32>
    %77 = arith.addf %73, %76 : vector<1x128xf32>
    %c0_30 = arith.constant 0 : index
    %c9 = arith.constant 9 : index
    %78 = memref.load %arg0[%c0_30, %c9] : memref<2x16xi32, #tpu.memory_space<smem>>
    %c1_31 = arith.constant 1 : index
    %c9_32 = arith.constant 9 : index
    %79 = memref.load %arg0[%c1_31, %c9_32] : memref<2x16xi32, #tpu.memory_space<smem>>
    %c0_i32_33 = arith.constant 0 : i32
    %80 = arith.addi %c0_i32_33, %78 : i32
    %81 = arith.index_cast %80 : i32 to index
    %c0_34 = arith.constant 0 : index
    %82 = vector.load %arg1[%81, %c0_34] : memref<224x128xf32, #tpu.memory_space<vmem>>, vector<1x128xf32>
    %c32_i32_35 = arith.constant 32 : i32
    %83 = arith.addi %c32_i32_35, %79 : i32
    %84 = arith.index_cast %83 : i32 to index
    %c0_36 = arith.constant 0 : index
    %85 = vector.load %arg1[%84, %c0_36] : memref<224x128xf32, #tpu.memory_space<vmem>>, vector<1x128xf32>
    %86 = arith.addf %82, %85 : vector<1x128xf32>
    %87 = tpu.concatenate %77, %86, %18 in 0 : vector<1x128xf32>, vector<1x128xf32>, vector<6x128xf32> -> vector<8x128xf32>
    %cst_37 = arith.constant dense<0.000000e+00> : vector<8x128xf32>
    %88 = tpu.matmul %51, %0, %cst_37 {dimension_numbers = #tpu.dot_dimension_numbers<[1], [0], [0], [1], [0, 0, 1, 1], [], []>} : vector<8x32xf32>, vector<32x128xf32>, vector<8x128xf32> -> vector<8x128xf32>
    %89 = arith.addf %87, %88 : vector<8x128xf32>
    %90 = arith.mulf %89, %14 : vector<8x128xf32>
    %91 = math.tanh %90 : vector<8x128xf32>
    %92 = arith.mulf %91, %14 : vector<8x128xf32>
    %93 = arith.addf %92, %17 : vector<8x128xf32>
    %94 = vector.extract_strided_slice %93 {offsets = [0, 0], sizes = [8, 32], strides = [1, 1]} : vector<8x128xf32> to vector<8x32xf32>
    %95 = vector.extract_strided_slice %93 {offsets = [0, 32], sizes = [8, 32], strides = [1, 1]} : vector<8x128xf32> to vector<8x32xf32>
    %96 = vector.extract_strided_slice %93 {offsets = [0, 64], sizes = [8, 32], strides = [1, 1]} : vector<8x128xf32> to vector<8x32xf32>
    %97 = vector.extract_strided_slice %93 {offsets = [0, 96], sizes = [8, 32], strides = [1, 1]} : vector<8x128xf32> to vector<8x32xf32>
    %98 = arith.mulf %95, %49 : vector<8x32xf32>
    %99 = arith.mulf %94, %96 : vector<8x32xf32>
    %100 = arith.addf %98, %99 : vector<8x32xf32>
    %101 = math.tanh %100 : vector<8x32xf32>
    %102 = arith.mulf %97, %101 : vector<8x32xf32>
    %cst_38 = arith.constant dense<0.000000e+00> : vector<8x128xf32>
    %103 = tpu.matmul %102, %1, %cst_38 {dimension_numbers = #tpu.dot_dimension_numbers<[1], [0], [0], [1], [0, 0, 1, 1], [], []>} : vector<8x32xf32>, vector<32x128xf32>, vector<8x128xf32> -> vector<8x128xf32>
    %104 = arith.addf %103, %68 : vector<8x128xf32>
    %105 = arith.mulf %104, %14 : vector<8x128xf32>
    %106 = math.tanh %105 : vector<8x128xf32>
    %107 = arith.mulf %106, %14 : vector<8x128xf32>
    %108 = arith.addf %107, %17 : vector<8x128xf32>
    %109 = vector.extract_strided_slice %108 {offsets = [0, 0], sizes = [8, 32], strides = [1, 1]} : vector<8x128xf32> to vector<8x32xf32>
    %110 = vector.extract_strided_slice %108 {offsets = [0, 32], sizes = [8, 32], strides = [1, 1]} : vector<8x128xf32> to vector<8x32xf32>
    %111 = vector.extract_strided_slice %108 {offsets = [0, 64], sizes = [8, 32], strides = [1, 1]} : vector<8x128xf32> to vector<8x32xf32>
    %112 = vector.extract_strided_slice %108 {offsets = [0, 96], sizes = [8, 32], strides = [1, 1]} : vector<8x128xf32> to vector<8x32xf32>
    %113 = arith.mulf %110, %64 : vector<8x32xf32>
    %114 = arith.mulf %109, %111 : vector<8x32xf32>
    %115 = arith.addf %113, %114 : vector<8x32xf32>
    %116 = math.tanh %115 : vector<8x32xf32>
    %117 = arith.mulf %112, %116 : vector<8x32xf32>
    %cst_39 = arith.constant dense<0.000000e+00> : vector<8x128xf32>
    %118 = tpu.matmul %117, %2, %cst_39 {dimension_numbers = #tpu.dot_dimension_numbers<[1], [0], [0], [1], [0, 0, 1, 1], [], []>} : vector<8x32xf32>, vector<32x128xf32>, vector<8x128xf32> -> vector<8x128xf32>
    %119 = arith.addf %118, %5 : vector<8x128xf32>
    %c0_40 = arith.constant 0 : index
    %c2 = arith.constant 2 : index
    %120 = memref.load %arg0[%c0_40, %c2] : memref<2x16xi32, #tpu.memory_space<smem>>
    %c1_41 = arith.constant 1 : index
    %c2_42 = arith.constant 2 : index
    %121 = memref.load %arg0[%c1_41, %c2_42] : memref<2x16xi32, #tpu.memory_space<smem>>
    %c0_i32_43 = arith.constant 0 : i32
    %122 = arith.addi %c0_i32_43, %120 : i32
    %123 = arith.index_cast %122 : i32 to index
    %c0_44 = arith.constant 0 : index
    %124 = vector.load %arg1[%123, %c0_44] : memref<224x128xf32, #tpu.memory_space<vmem>>, vector<1x128xf32>
    %c32_i32_45 = arith.constant 32 : i32
    %125 = arith.addi %c32_i32_45, %121 : i32
    %126 = arith.index_cast %125 : i32 to index
    %c0_46 = arith.constant 0 : index
    %127 = vector.load %arg1[%126, %c0_46] : memref<224x128xf32, #tpu.memory_space<vmem>>, vector<1x128xf32>
    %128 = arith.addf %124, %127 : vector<1x128xf32>
    %c0_47 = arith.constant 0 : index
    %c10 = arith.constant 10 : index
    %129 = memref.load %arg0[%c0_47, %c10] : memref<2x16xi32, #tpu.memory_space<smem>>
    %c1_48 = arith.constant 1 : index
    %c10_49 = arith.constant 10 : index
    %130 = memref.load %arg0[%c1_48, %c10_49] : memref<2x16xi32, #tpu.memory_space<smem>>
    %c0_i32_50 = arith.constant 0 : i32
    %131 = arith.addi %c0_i32_50, %129 : i32
    %132 = arith.index_cast %131 : i32 to index
    %c0_51 = arith.constant 0 : index
    %133 = vector.load %arg1[%132, %c0_51] : memref<224x128xf32, #tpu.memory_space<vmem>>, vector<1x128xf32>
    %c32_i32_52 = arith.constant 32 : i32
    %134 = arith.addi %c32_i32_52, %130 : i32
    %135 = arith.index_cast %134 : i32 to index
    %c0_53 = arith.constant 0 : index
    %136 = vector.load %arg1[%135, %c0_53] : memref<224x128xf32, #tpu.memory_space<vmem>>, vector<1x128xf32>
    %137 = arith.addf %133, %136 : vector<1x128xf32>
    %138 = tpu.concatenate %128, %137, %18 in 0 : vector<1x128xf32>, vector<1x128xf32>, vector<6x128xf32> -> vector<8x128xf32>
    %cst_54 = arith.constant dense<0.000000e+00> : vector<8x128xf32>
    %139 = tpu.matmul %102, %0, %cst_54 {dimension_numbers = #tpu.dot_dimension_numbers<[1], [0], [0], [1], [0, 0, 1, 1], [], []>} : vector<8x32xf32>, vector<32x128xf32>, vector<8x128xf32> -> vector<8x128xf32>
    %140 = arith.addf %138, %139 : vector<8x128xf32>
    %141 = arith.mulf %140, %14 : vector<8x128xf32>
    %142 = math.tanh %141 : vector<8x128xf32>
    %143 = arith.mulf %142, %14 : vector<8x128xf32>
    %144 = arith.addf %143, %17 : vector<8x128xf32>
    %145 = vector.extract_strided_slice %144 {offsets = [0, 0], sizes = [8, 32], strides = [1, 1]} : vector<8x128xf32> to vector<8x32xf32>
    %146 = vector.extract_strided_slice %144 {offsets = [0, 32], sizes = [8, 32], strides = [1, 1]} : vector<8x128xf32> to vector<8x32xf32>
    %147 = vector.extract_strided_slice %144 {offsets = [0, 64], sizes = [8, 32], strides = [1, 1]} : vector<8x128xf32> to vector<8x32xf32>
    %148 = vector.extract_strided_slice %144 {offsets = [0, 96], sizes = [8, 32], strides = [1, 1]} : vector<8x128xf32> to vector<8x32xf32>
    %149 = arith.mulf %146, %100 : vector<8x32xf32>
    %150 = arith.mulf %145, %147 : vector<8x32xf32>
    %151 = arith.addf %149, %150 : vector<8x32xf32>
    %152 = math.tanh %151 : vector<8x32xf32>
    %153 = arith.mulf %148, %152 : vector<8x32xf32>
    %cst_55 = arith.constant dense<0.000000e+00> : vector<8x128xf32>
    %154 = tpu.matmul %153, %1, %cst_55 {dimension_numbers = #tpu.dot_dimension_numbers<[1], [0], [0], [1], [0, 0, 1, 1], [], []>} : vector<8x32xf32>, vector<32x128xf32>, vector<8x128xf32> -> vector<8x128xf32>
    %155 = arith.addf %154, %119 : vector<8x128xf32>
    %156 = arith.mulf %155, %14 : vector<8x128xf32>
    %157 = math.tanh %156 : vector<8x128xf32>
    %158 = arith.mulf %157, %14 : vector<8x128xf32>
    %159 = arith.addf %158, %17 : vector<8x128xf32>
    %160 = vector.extract_strided_slice %159 {offsets = [0, 0], sizes = [8, 32], strides = [1, 1]} : vector<8x128xf32> to vector<8x32xf32>
    %161 = vector.extract_strided_slice %159 {offsets = [0, 32], sizes = [8, 32], strides = [1, 1]} : vector<8x128xf32> to vector<8x32xf32>
    %162 = vector.extract_strided_slice %159 {offsets = [0, 64], sizes = [8, 32], strides = [1, 1]} : vector<8x128xf32> to vector<8x32xf32>
    %163 = vector.extract_strided_slice %159 {offsets = [0, 96], sizes = [8, 32], strides = [1, 1]} : vector<8x128xf32> to vector<8x32xf32>
    %164 = arith.mulf %161, %115 : vector<8x32xf32>
    %165 = arith.mulf %160, %162 : vector<8x32xf32>
    %166 = arith.addf %164, %165 : vector<8x32xf32>
    %167 = math.tanh %166 : vector<8x32xf32>
    %168 = arith.mulf %163, %167 : vector<8x32xf32>
    %cst_56 = arith.constant dense<0.000000e+00> : vector<8x128xf32>
    %169 = tpu.matmul %168, %2, %cst_56 {dimension_numbers = #tpu.dot_dimension_numbers<[1], [0], [0], [1], [0, 0, 1, 1], [], []>} : vector<8x32xf32>, vector<32x128xf32>, vector<8x128xf32> -> vector<8x128xf32>
    %170 = arith.addf %169, %5 : vector<8x128xf32>
    %c0_57 = arith.constant 0 : index
    %c3 = arith.constant 3 : index
    %171 = memref.load %arg0[%c0_57, %c3] : memref<2x16xi32, #tpu.memory_space<smem>>
    %c1_58 = arith.constant 1 : index
    %c3_59 = arith.constant 3 : index
    %172 = memref.load %arg0[%c1_58, %c3_59] : memref<2x16xi32, #tpu.memory_space<smem>>
    %c0_i32_60 = arith.constant 0 : i32
    %173 = arith.addi %c0_i32_60, %171 : i32
    %174 = arith.index_cast %173 : i32 to index
    %c0_61 = arith.constant 0 : index
    %175 = vector.load %arg1[%174, %c0_61] : memref<224x128xf32, #tpu.memory_space<vmem>>, vector<1x128xf32>
    %c32_i32_62 = arith.constant 32 : i32
    %176 = arith.addi %c32_i32_62, %172 : i32
    %177 = arith.index_cast %176 : i32 to index
    %c0_63 = arith.constant 0 : index
    %178 = vector.load %arg1[%177, %c0_63] : memref<224x128xf32, #tpu.memory_space<vmem>>, vector<1x128xf32>
    %179 = arith.addf %175, %178 : vector<1x128xf32>
    %c0_64 = arith.constant 0 : index
    %c11 = arith.constant 11 : index
    %180 = memref.load %arg0[%c0_64, %c11] : memref<2x16xi32, #tpu.memory_space<smem>>
    %c1_65 = arith.constant 1 : index
    %c11_66 = arith.constant 11 : index
    %181 = memref.load %arg0[%c1_65, %c11_66] : memref<2x16xi32, #tpu.memory_space<smem>>
    %c0_i32_67 = arith.constant 0 : i32
    %182 = arith.addi %c0_i32_67, %180 : i32
    %183 = arith.index_cast %182 : i32 to index
    %c0_68 = arith.constant 0 : index
    %184 = vector.load %arg1[%183, %c0_68] : memref<224x128xf32, #tpu.memory_space<vmem>>, vector<1x128xf32>
    %c32_i32_69 = arith.constant 32 : i32
    %185 = arith.addi %c32_i32_69, %181 : i32
    %186 = arith.index_cast %185 : i32 to index
    %c0_70 = arith.constant 0 : index
    %187 = vector.load %arg1[%186, %c0_70] : memref<224x128xf32, #tpu.memory_space<vmem>>, vector<1x128xf32>
    %188 = arith.addf %184, %187 : vector<1x128xf32>
    %189 = tpu.concatenate %179, %188, %18 in 0 : vector<1x128xf32>, vector<1x128xf32>, vector<6x128xf32> -> vector<8x128xf32>
    %cst_71 = arith.constant dense<0.000000e+00> : vector<8x128xf32>
    %190 = tpu.matmul %153, %0, %cst_71 {dimension_numbers = #tpu.dot_dimension_numbers<[1], [0], [0], [1], [0, 0, 1, 1], [], []>} : vector<8x32xf32>, vector<32x128xf32>, vector<8x128xf32> -> vector<8x128xf32>
    %191 = arith.addf %189, %190 : vector<8x128xf32>
    %192 = arith.mulf %191, %14 : vector<8x128xf32>
    %193 = math.tanh %192 : vector<8x128xf32>
    %194 = arith.mulf %193, %14 : vector<8x128xf32>
    %195 = arith.addf %194, %17 : vector<8x128xf32>
    %196 = vector.extract_strided_slice %195 {offsets = [0, 0], sizes = [8, 32], strides = [1, 1]} : vector<8x128xf32> to vector<8x32xf32>
    %197 = vector.extract_strided_slice %195 {offsets = [0, 32], sizes = [8, 32], strides = [1, 1]} : vector<8x128xf32> to vector<8x32xf32>
    %198 = vector.extract_strided_slice %195 {offsets = [0, 64], sizes = [8, 32], strides = [1, 1]} : vector<8x128xf32> to vector<8x32xf32>
    %199 = vector.extract_strided_slice %195 {offsets = [0, 96], sizes = [8, 32], strides = [1, 1]} : vector<8x128xf32> to vector<8x32xf32>
    %200 = arith.mulf %197, %151 : vector<8x32xf32>
    %201 = arith.mulf %196, %198 : vector<8x32xf32>
    %202 = arith.addf %200, %201 : vector<8x32xf32>
    %203 = math.tanh %202 : vector<8x32xf32>
    %204 = arith.mulf %199, %203 : vector<8x32xf32>
    %cst_72 = arith.constant dense<0.000000e+00> : vector<8x128xf32>
    %205 = tpu.matmul %204, %1, %cst_72 {dimension_numbers = #tpu.dot_dimension_numbers<[1], [0], [0], [1], [0, 0, 1, 1], [], []>} : vector<8x32xf32>, vector<32x128xf32>, vector<8x128xf32> -> vector<8x128xf32>
    %206 = arith.addf %205, %170 : vector<8x128xf32>
    %207 = arith.mulf %206, %14 : vector<8x128xf32>
    %208 = math.tanh %207 : vector<8x128xf32>
    %209 = arith.mulf %208, %14 : vector<8x128xf32>
    %210 = arith.addf %209, %17 : vector<8x128xf32>
    %211 = vector.extract_strided_slice %210 {offsets = [0, 0], sizes = [8, 32], strides = [1, 1]} : vector<8x128xf32> to vector<8x32xf32>
    %212 = vector.extract_strided_slice %210 {offsets = [0, 32], sizes = [8, 32], strides = [1, 1]} : vector<8x128xf32> to vector<8x32xf32>
    %213 = vector.extract_strided_slice %210 {offsets = [0, 64], sizes = [8, 32], strides = [1, 1]} : vector<8x128xf32> to vector<8x32xf32>
    %214 = vector.extract_strided_slice %210 {offsets = [0, 96], sizes = [8, 32], strides = [1, 1]} : vector<8x128xf32> to vector<8x32xf32>
    %215 = arith.mulf %212, %166 : vector<8x32xf32>
    %216 = arith.mulf %211, %213 : vector<8x32xf32>
    %217 = arith.addf %215, %216 : vector<8x32xf32>
    %218 = math.tanh %217 : vector<8x32xf32>
    %219 = arith.mulf %214, %218 : vector<8x32xf32>
    %cst_73 = arith.constant dense<0.000000e+00> : vector<8x128xf32>
    %220 = tpu.matmul %219, %2, %cst_73 {dimension_numbers = #tpu.dot_dimension_numbers<[1], [0], [0], [1], [0, 0, 1, 1], [], []>} : vector<8x32xf32>, vector<32x128xf32>, vector<8x128xf32> -> vector<8x128xf32>
    %221 = arith.addf %220, %5 : vector<8x128xf32>
    %c0_74 = arith.constant 0 : index
    %c4 = arith.constant 4 : index
    %222 = memref.load %arg0[%c0_74, %c4] : memref<2x16xi32, #tpu.memory_space<smem>>
    %c1_75 = arith.constant 1 : index
    %c4_76 = arith.constant 4 : index
    %223 = memref.load %arg0[%c1_75, %c4_76] : memref<2x16xi32, #tpu.memory_space<smem>>
    %c0_i32_77 = arith.constant 0 : i32
    %224 = arith.addi %c0_i32_77, %222 : i32
    %225 = arith.index_cast %224 : i32 to index
    %c0_78 = arith.constant 0 : index
    %226 = vector.load %arg1[%225, %c0_78] : memref<224x128xf32, #tpu.memory_space<vmem>>, vector<1x128xf32>
    %c32_i32_79 = arith.constant 32 : i32
    %227 = arith.addi %c32_i32_79, %223 : i32
    %228 = arith.index_cast %227 : i32 to index
    %c0_80 = arith.constant 0 : index
    %229 = vector.load %arg1[%228, %c0_80] : memref<224x128xf32, #tpu.memory_space<vmem>>, vector<1x128xf32>
    %230 = arith.addf %226, %229 : vector<1x128xf32>
    %c0_81 = arith.constant 0 : index
    %c12 = arith.constant 12 : index
    %231 = memref.load %arg0[%c0_81, %c12] : memref<2x16xi32, #tpu.memory_space<smem>>
    %c1_82 = arith.constant 1 : index
    %c12_83 = arith.constant 12 : index
    %232 = memref.load %arg0[%c1_82, %c12_83] : memref<2x16xi32, #tpu.memory_space<smem>>
    %c0_i32_84 = arith.constant 0 : i32
    %233 = arith.addi %c0_i32_84, %231 : i32
    %234 = arith.index_cast %233 : i32 to index
    %c0_85 = arith.constant 0 : index
    %235 = vector.load %arg1[%234, %c0_85] : memref<224x128xf32, #tpu.memory_space<vmem>>, vector<1x128xf32>
    %c32_i32_86 = arith.constant 32 : i32
    %236 = arith.addi %c32_i32_86, %232 : i32
    %237 = arith.index_cast %236 : i32 to index
    %c0_87 = arith.constant 0 : index
    %238 = vector.load %arg1[%237, %c0_87] : memref<224x128xf32, #tpu.memory_space<vmem>>, vector<1x128xf32>
    %239 = arith.addf %235, %238 : vector<1x128xf32>
    %240 = tpu.concatenate %230, %239, %18 in 0 : vector<1x128xf32>, vector<1x128xf32>, vector<6x128xf32> -> vector<8x128xf32>
    %cst_88 = arith.constant dense<0.000000e+00> : vector<8x128xf32>
    %241 = tpu.matmul %204, %0, %cst_88 {dimension_numbers = #tpu.dot_dimension_numbers<[1], [0], [0], [1], [0, 0, 1, 1], [], []>} : vector<8x32xf32>, vector<32x128xf32>, vector<8x128xf32> -> vector<8x128xf32>
    %242 = arith.addf %240, %241 : vector<8x128xf32>
    %243 = arith.mulf %242, %14 : vector<8x128xf32>
    %244 = math.tanh %243 : vector<8x128xf32>
    %245 = arith.mulf %244, %14 : vector<8x128xf32>
    %246 = arith.addf %245, %17 : vector<8x128xf32>
    %247 = vector.extract_strided_slice %246 {offsets = [0, 0], sizes = [8, 32], strides = [1, 1]} : vector<8x128xf32> to vector<8x32xf32>
    %248 = vector.extract_strided_slice %246 {offsets = [0, 32], sizes = [8, 32], strides = [1, 1]} : vector<8x128xf32> to vector<8x32xf32>
    %249 = vector.extract_strided_slice %246 {offsets = [0, 64], sizes = [8, 32], strides = [1, 1]} : vector<8x128xf32> to vector<8x32xf32>
    %250 = vector.extract_strided_slice %246 {offsets = [0, 96], sizes = [8, 32], strides = [1, 1]} : vector<8x128xf32> to vector<8x32xf32>
    %251 = arith.mulf %248, %202 : vector<8x32xf32>
    %252 = arith.mulf %247, %249 : vector<8x32xf32>
    %253 = arith.addf %251, %252 : vector<8x32xf32>
    %254 = math.tanh %253 : vector<8x32xf32>
    %255 = arith.mulf %250, %254 : vector<8x32xf32>
    %cst_89 = arith.constant dense<0.000000e+00> : vector<8x128xf32>
    %256 = tpu.matmul %255, %1, %cst_89 {dimension_numbers = #tpu.dot_dimension_numbers<[1], [0], [0], [1], [0, 0, 1, 1], [], []>} : vector<8x32xf32>, vector<32x128xf32>, vector<8x128xf32> -> vector<8x128xf32>
    %257 = arith.addf %256, %221 : vector<8x128xf32>
    %258 = arith.mulf %257, %14 : vector<8x128xf32>
    %259 = math.tanh %258 : vector<8x128xf32>
    %260 = arith.mulf %259, %14 : vector<8x128xf32>
    %261 = arith.addf %260, %17 : vector<8x128xf32>
    %262 = vector.extract_strided_slice %261 {offsets = [0, 0], sizes = [8, 32], strides = [1, 1]} : vector<8x128xf32> to vector<8x32xf32>
    %263 = vector.extract_strided_slice %261 {offsets = [0, 32], sizes = [8, 32], strides = [1, 1]} : vector<8x128xf32> to vector<8x32xf32>
    %264 = vector.extract_strided_slice %261 {offsets = [0, 64], sizes = [8, 32], strides = [1, 1]} : vector<8x128xf32> to vector<8x32xf32>
    %265 = vector.extract_strided_slice %261 {offsets = [0, 96], sizes = [8, 32], strides = [1, 1]} : vector<8x128xf32> to vector<8x32xf32>
    %266 = arith.mulf %263, %217 : vector<8x32xf32>
    %267 = arith.mulf %262, %264 : vector<8x32xf32>
    %268 = arith.addf %266, %267 : vector<8x32xf32>
    %269 = math.tanh %268 : vector<8x32xf32>
    %270 = arith.mulf %265, %269 : vector<8x32xf32>
    %cst_90 = arith.constant dense<0.000000e+00> : vector<8x128xf32>
    %271 = tpu.matmul %270, %2, %cst_90 {dimension_numbers = #tpu.dot_dimension_numbers<[1], [0], [0], [1], [0, 0, 1, 1], [], []>} : vector<8x32xf32>, vector<32x128xf32>, vector<8x128xf32> -> vector<8x128xf32>
    %272 = arith.addf %271, %5 : vector<8x128xf32>
    %c0_91 = arith.constant 0 : index
    %c5 = arith.constant 5 : index
    %273 = memref.load %arg0[%c0_91, %c5] : memref<2x16xi32, #tpu.memory_space<smem>>
    %c1_92 = arith.constant 1 : index
    %c5_93 = arith.constant 5 : index
    %274 = memref.load %arg0[%c1_92, %c5_93] : memref<2x16xi32, #tpu.memory_space<smem>>
    %c0_i32_94 = arith.constant 0 : i32
    %275 = arith.addi %c0_i32_94, %273 : i32
    %276 = arith.index_cast %275 : i32 to index
    %c0_95 = arith.constant 0 : index
    %277 = vector.load %arg1[%276, %c0_95] : memref<224x128xf32, #tpu.memory_space<vmem>>, vector<1x128xf32>
    %c32_i32_96 = arith.constant 32 : i32
    %278 = arith.addi %c32_i32_96, %274 : i32
    %279 = arith.index_cast %278 : i32 to index
    %c0_97 = arith.constant 0 : index
    %280 = vector.load %arg1[%279, %c0_97] : memref<224x128xf32, #tpu.memory_space<vmem>>, vector<1x128xf32>
    %281 = arith.addf %277, %280 : vector<1x128xf32>
    %c0_98 = arith.constant 0 : index
    %c13 = arith.constant 13 : index
    %282 = memref.load %arg0[%c0_98, %c13] : memref<2x16xi32, #tpu.memory_space<smem>>
    %c1_99 = arith.constant 1 : index
    %c13_100 = arith.constant 13 : index
    %283 = memref.load %arg0[%c1_99, %c13_100] : memref<2x16xi32, #tpu.memory_space<smem>>
    %c0_i32_101 = arith.constant 0 : i32
    %284 = arith.addi %c0_i32_101, %282 : i32
    %285 = arith.index_cast %284 : i32 to index
    %c0_102 = arith.constant 0 : index
    %286 = vector.load %arg1[%285, %c0_102] : memref<224x128xf32, #tpu.memory_space<vmem>>, vector<1x128xf32>
    %c32_i32_103 = arith.constant 32 : i32
    %287 = arith.addi %c32_i32_103, %283 : i32
    %288 = arith.index_cast %287 : i32 to index
    %c0_104 = arith.constant 0 : index
    %289 = vector.load %arg1[%288, %c0_104] : memref<224x128xf32, #tpu.memory_space<vmem>>, vector<1x128xf32>
    %290 = arith.addf %286, %289 : vector<1x128xf32>
    %291 = tpu.concatenate %281, %290, %18 in 0 : vector<1x128xf32>, vector<1x128xf32>, vector<6x128xf32> -> vector<8x128xf32>
    %cst_105 = arith.constant dense<0.000000e+00> : vector<8x128xf32>
    %292 = tpu.matmul %255, %0, %cst_105 {dimension_numbers = #tpu.dot_dimension_numbers<[1], [0], [0], [1], [0, 0, 1, 1], [], []>} : vector<8x32xf32>, vector<32x128xf32>, vector<8x128xf32> -> vector<8x128xf32>
    %293 = arith.addf %291, %292 : vector<8x128xf32>
    %294 = arith.mulf %293, %14 : vector<8x128xf32>
    %295 = math.tanh %294 : vector<8x128xf32>
    %296 = arith.mulf %295, %14 : vector<8x128xf32>
    %297 = arith.addf %296, %17 : vector<8x128xf32>
    %298 = vector.extract_strided_slice %297 {offsets = [0, 0], sizes = [8, 32], strides = [1, 1]} : vector<8x128xf32> to vector<8x32xf32>
    %299 = vector.extract_strided_slice %297 {offsets = [0, 32], sizes = [8, 32], strides = [1, 1]} : vector<8x128xf32> to vector<8x32xf32>
    %300 = vector.extract_strided_slice %297 {offsets = [0, 64], sizes = [8, 32], strides = [1, 1]} : vector<8x128xf32> to vector<8x32xf32>
    %301 = vector.extract_strided_slice %297 {offsets = [0, 96], sizes = [8, 32], strides = [1, 1]} : vector<8x128xf32> to vector<8x32xf32>
    %302 = arith.mulf %299, %253 : vector<8x32xf32>
    %303 = arith.mulf %298, %300 : vector<8x32xf32>
    %304 = arith.addf %302, %303 : vector<8x32xf32>
    %305 = math.tanh %304 : vector<8x32xf32>
    %306 = arith.mulf %301, %305 : vector<8x32xf32>
    %cst_106 = arith.constant dense<0.000000e+00> : vector<8x128xf32>
    %307 = tpu.matmul %306, %1, %cst_106 {dimension_numbers = #tpu.dot_dimension_numbers<[1], [0], [0], [1], [0, 0, 1, 1], [], []>} : vector<8x32xf32>, vector<32x128xf32>, vector<8x128xf32> -> vector<8x128xf32>
    %308 = arith.addf %307, %272 : vector<8x128xf32>
    %309 = arith.mulf %308, %14 : vector<8x128xf32>
    %310 = math.tanh %309 : vector<8x128xf32>
    %311 = arith.mulf %310, %14 : vector<8x128xf32>
    %312 = arith.addf %311, %17 : vector<8x128xf32>
    %313 = vector.extract_strided_slice %312 {offsets = [0, 0], sizes = [8, 32], strides = [1, 1]} : vector<8x128xf32> to vector<8x32xf32>
    %314 = vector.extract_strided_slice %312 {offsets = [0, 32], sizes = [8, 32], strides = [1, 1]} : vector<8x128xf32> to vector<8x32xf32>
    %315 = vector.extract_strided_slice %312 {offsets = [0, 64], sizes = [8, 32], strides = [1, 1]} : vector<8x128xf32> to vector<8x32xf32>
    %316 = vector.extract_strided_slice %312 {offsets = [0, 96], sizes = [8, 32], strides = [1, 1]} : vector<8x128xf32> to vector<8x32xf32>
    %317 = arith.mulf %314, %268 : vector<8x32xf32>
    %318 = arith.mulf %313, %315 : vector<8x32xf32>
    %319 = arith.addf %317, %318 : vector<8x32xf32>
    %320 = math.tanh %319 : vector<8x32xf32>
    %321 = arith.mulf %316, %320 : vector<8x32xf32>
    %cst_107 = arith.constant dense<0.000000e+00> : vector<8x128xf32>
    %322 = tpu.matmul %321, %2, %cst_107 {dimension_numbers = #tpu.dot_dimension_numbers<[1], [0], [0], [1], [0, 0, 1, 1], [], []>} : vector<8x32xf32>, vector<32x128xf32>, vector<8x128xf32> -> vector<8x128xf32>
    %323 = arith.addf %322, %5 : vector<8x128xf32>
    %c0_108 = arith.constant 0 : index
    %c6 = arith.constant 6 : index
    %324 = memref.load %arg0[%c0_108, %c6] : memref<2x16xi32, #tpu.memory_space<smem>>
    %c1_109 = arith.constant 1 : index
    %c6_110 = arith.constant 6 : index
    %325 = memref.load %arg0[%c1_109, %c6_110] : memref<2x16xi32, #tpu.memory_space<smem>>
    %c0_i32_111 = arith.constant 0 : i32
    %326 = arith.addi %c0_i32_111, %324 : i32
    %327 = arith.index_cast %326 : i32 to index
    %c0_112 = arith.constant 0 : index
    %328 = vector.load %arg1[%327, %c0_112] : memref<224x128xf32, #tpu.memory_space<vmem>>, vector<1x128xf32>
    %c32_i32_113 = arith.constant 32 : i32
    %329 = arith.addi %c32_i32_113, %325 : i32
    %330 = arith.index_cast %329 : i32 to index
    %c0_114 = arith.constant 0 : index
    %331 = vector.load %arg1[%330, %c0_114] : memref<224x128xf32, #tpu.memory_space<vmem>>, vector<1x128xf32>
    %332 = arith.addf %328, %331 : vector<1x128xf32>
    %c0_115 = arith.constant 0 : index
    %c14 = arith.constant 14 : index
    %333 = memref.load %arg0[%c0_115, %c14] : memref<2x16xi32, #tpu.memory_space<smem>>
    %c1_116 = arith.constant 1 : index
    %c14_117 = arith.constant 14 : index
    %334 = memref.load %arg0[%c1_116, %c14_117] : memref<2x16xi32, #tpu.memory_space<smem>>
    %c0_i32_118 = arith.constant 0 : i32
    %335 = arith.addi %c0_i32_118, %333 : i32
    %336 = arith.index_cast %335 : i32 to index
    %c0_119 = arith.constant 0 : index
    %337 = vector.load %arg1[%336, %c0_119] : memref<224x128xf32, #tpu.memory_space<vmem>>, vector<1x128xf32>
    %c32_i32_120 = arith.constant 32 : i32
    %338 = arith.addi %c32_i32_120, %334 : i32
    %339 = arith.index_cast %338 : i32 to index
    %c0_121 = arith.constant 0 : index
    %340 = vector.load %arg1[%339, %c0_121] : memref<224x128xf32, #tpu.memory_space<vmem>>, vector<1x128xf32>
    %341 = arith.addf %337, %340 : vector<1x128xf32>
    %342 = tpu.concatenate %332, %341, %18 in 0 : vector<1x128xf32>, vector<1x128xf32>, vector<6x128xf32> -> vector<8x128xf32>
    %cst_122 = arith.constant dense<0.000000e+00> : vector<8x128xf32>
    %343 = tpu.matmul %306, %0, %cst_122 {dimension_numbers = #tpu.dot_dimension_numbers<[1], [0], [0], [1], [0, 0, 1, 1], [], []>} : vector<8x32xf32>, vector<32x128xf32>, vector<8x128xf32> -> vector<8x128xf32>
    %344 = arith.addf %342, %343 : vector<8x128xf32>
    %345 = arith.mulf %344, %14 : vector<8x128xf32>
    %346 = math.tanh %345 : vector<8x128xf32>
    %347 = arith.mulf %346, %14 : vector<8x128xf32>
    %348 = arith.addf %347, %17 : vector<8x128xf32>
    %349 = vector.extract_strided_slice %348 {offsets = [0, 0], sizes = [8, 32], strides = [1, 1]} : vector<8x128xf32> to vector<8x32xf32>
    %350 = vector.extract_strided_slice %348 {offsets = [0, 32], sizes = [8, 32], strides = [1, 1]} : vector<8x128xf32> to vector<8x32xf32>
    %351 = vector.extract_strided_slice %348 {offsets = [0, 64], sizes = [8, 32], strides = [1, 1]} : vector<8x128xf32> to vector<8x32xf32>
    %352 = vector.extract_strided_slice %348 {offsets = [0, 96], sizes = [8, 32], strides = [1, 1]} : vector<8x128xf32> to vector<8x32xf32>
    %353 = arith.mulf %350, %304 : vector<8x32xf32>
    %354 = arith.mulf %349, %351 : vector<8x32xf32>
    %355 = arith.addf %353, %354 : vector<8x32xf32>
    %356 = math.tanh %355 : vector<8x32xf32>
    %357 = arith.mulf %352, %356 : vector<8x32xf32>
    %cst_123 = arith.constant dense<0.000000e+00> : vector<8x128xf32>
    %358 = tpu.matmul %357, %1, %cst_123 {dimension_numbers = #tpu.dot_dimension_numbers<[1], [0], [0], [1], [0, 0, 1, 1], [], []>} : vector<8x32xf32>, vector<32x128xf32>, vector<8x128xf32> -> vector<8x128xf32>
    %359 = arith.addf %358, %323 : vector<8x128xf32>
    %360 = arith.mulf %359, %14 : vector<8x128xf32>
    %361 = math.tanh %360 : vector<8x128xf32>
    %362 = arith.mulf %361, %14 : vector<8x128xf32>
    %363 = arith.addf %362, %17 : vector<8x128xf32>
    %364 = vector.extract_strided_slice %363 {offsets = [0, 0], sizes = [8, 32], strides = [1, 1]} : vector<8x128xf32> to vector<8x32xf32>
    %365 = vector.extract_strided_slice %363 {offsets = [0, 32], sizes = [8, 32], strides = [1, 1]} : vector<8x128xf32> to vector<8x32xf32>
    %366 = vector.extract_strided_slice %363 {offsets = [0, 64], sizes = [8, 32], strides = [1, 1]} : vector<8x128xf32> to vector<8x32xf32>
    %367 = vector.extract_strided_slice %363 {offsets = [0, 96], sizes = [8, 32], strides = [1, 1]} : vector<8x128xf32> to vector<8x32xf32>
    %368 = arith.mulf %365, %319 : vector<8x32xf32>
    %369 = arith.mulf %364, %366 : vector<8x32xf32>
    %370 = arith.addf %368, %369 : vector<8x32xf32>
    %371 = math.tanh %370 : vector<8x32xf32>
    %372 = arith.mulf %367, %371 : vector<8x32xf32>
    %cst_124 = arith.constant dense<0.000000e+00> : vector<8x128xf32>
    %373 = tpu.matmul %372, %2, %cst_124 {dimension_numbers = #tpu.dot_dimension_numbers<[1], [0], [0], [1], [0, 0, 1, 1], [], []>} : vector<8x32xf32>, vector<32x128xf32>, vector<8x128xf32> -> vector<8x128xf32>
    %374 = arith.addf %373, %5 : vector<8x128xf32>
    %c0_125 = arith.constant 0 : index
    %c7 = arith.constant 7 : index
    %375 = memref.load %arg0[%c0_125, %c7] : memref<2x16xi32, #tpu.memory_space<smem>>
    %c1_126 = arith.constant 1 : index
    %c7_127 = arith.constant 7 : index
    %376 = memref.load %arg0[%c1_126, %c7_127] : memref<2x16xi32, #tpu.memory_space<smem>>
    %c0_i32_128 = arith.constant 0 : i32
    %377 = arith.addi %c0_i32_128, %375 : i32
    %378 = arith.index_cast %377 : i32 to index
    %c0_129 = arith.constant 0 : index
    %379 = vector.load %arg1[%378, %c0_129] : memref<224x128xf32, #tpu.memory_space<vmem>>, vector<1x128xf32>
    %c32_i32_130 = arith.constant 32 : i32
    %380 = arith.addi %c32_i32_130, %376 : i32
    %381 = arith.index_cast %380 : i32 to index
    %c0_131 = arith.constant 0 : index
    %382 = vector.load %arg1[%381, %c0_131] : memref<224x128xf32, #tpu.memory_space<vmem>>, vector<1x128xf32>
    %383 = arith.addf %379, %382 : vector<1x128xf32>
    %c0_132 = arith.constant 0 : index
    %c15 = arith.constant 15 : index
    %384 = memref.load %arg0[%c0_132, %c15] : memref<2x16xi32, #tpu.memory_space<smem>>
    %c1_133 = arith.constant 1 : index
    %c15_134 = arith.constant 15 : index
    %385 = memref.load %arg0[%c1_133, %c15_134] : memref<2x16xi32, #tpu.memory_space<smem>>
    %c0_i32_135 = arith.constant 0 : i32
    %386 = arith.addi %c0_i32_135, %384 : i32
    %387 = arith.index_cast %386 : i32 to index
    %c0_136 = arith.constant 0 : index
    %388 = vector.load %arg1[%387, %c0_136] : memref<224x128xf32, #tpu.memory_space<vmem>>, vector<1x128xf32>
    %c32_i32_137 = arith.constant 32 : i32
    %389 = arith.addi %c32_i32_137, %385 : i32
    %390 = arith.index_cast %389 : i32 to index
    %c0_138 = arith.constant 0 : index
    %391 = vector.load %arg1[%390, %c0_138] : memref<224x128xf32, #tpu.memory_space<vmem>>, vector<1x128xf32>
    %392 = arith.addf %388, %391 : vector<1x128xf32>
    %393 = tpu.concatenate %383, %392, %18 in 0 : vector<1x128xf32>, vector<1x128xf32>, vector<6x128xf32> -> vector<8x128xf32>
    %cst_139 = arith.constant dense<0.000000e+00> : vector<8x128xf32>
    %394 = tpu.matmul %357, %0, %cst_139 {dimension_numbers = #tpu.dot_dimension_numbers<[1], [0], [0], [1], [0, 0, 1, 1], [], []>} : vector<8x32xf32>, vector<32x128xf32>, vector<8x128xf32> -> vector<8x128xf32>
    %395 = arith.addf %393, %394 : vector<8x128xf32>
    %396 = arith.mulf %395, %14 : vector<8x128xf32>
    %397 = math.tanh %396 : vector<8x128xf32>
    %398 = arith.mulf %397, %14 : vector<8x128xf32>
    %399 = arith.addf %398, %17 : vector<8x128xf32>
    %400 = vector.extract_strided_slice %399 {offsets = [0, 0], sizes = [8, 32], strides = [1, 1]} : vector<8x128xf32> to vector<8x32xf32>
    %401 = vector.extract_strided_slice %399 {offsets = [0, 32], sizes = [8, 32], strides = [1, 1]} : vector<8x128xf32> to vector<8x32xf32>
    %402 = vector.extract_strided_slice %399 {offsets = [0, 64], sizes = [8, 32], strides = [1, 1]} : vector<8x128xf32> to vector<8x32xf32>
    %403 = vector.extract_strided_slice %399 {offsets = [0, 96], sizes = [8, 32], strides = [1, 1]} : vector<8x128xf32> to vector<8x32xf32>
    %404 = arith.mulf %401, %355 : vector<8x32xf32>
    %405 = arith.mulf %400, %402 : vector<8x32xf32>
    %406 = arith.addf %404, %405 : vector<8x32xf32>
    %407 = math.tanh %406 : vector<8x32xf32>
    %408 = arith.mulf %403, %407 : vector<8x32xf32>
    %cst_140 = arith.constant dense<0.000000e+00> : vector<8x128xf32>
    %409 = tpu.matmul %408, %1, %cst_140 {dimension_numbers = #tpu.dot_dimension_numbers<[1], [0], [0], [1], [0, 0, 1, 1], [], []>} : vector<8x32xf32>, vector<32x128xf32>, vector<8x128xf32> -> vector<8x128xf32>
    %410 = arith.addf %409, %374 : vector<8x128xf32>
    %411 = arith.mulf %410, %14 : vector<8x128xf32>
    %412 = math.tanh %411 : vector<8x128xf32>
    %413 = arith.mulf %412, %14 : vector<8x128xf32>
    %414 = arith.addf %413, %17 : vector<8x128xf32>
    %415 = vector.extract_strided_slice %414 {offsets = [0, 0], sizes = [8, 32], strides = [1, 1]} : vector<8x128xf32> to vector<8x32xf32>
    %416 = vector.extract_strided_slice %414 {offsets = [0, 32], sizes = [8, 32], strides = [1, 1]} : vector<8x128xf32> to vector<8x32xf32>
    %417 = vector.extract_strided_slice %414 {offsets = [0, 64], sizes = [8, 32], strides = [1, 1]} : vector<8x128xf32> to vector<8x32xf32>
    %418 = vector.extract_strided_slice %414 {offsets = [0, 96], sizes = [8, 32], strides = [1, 1]} : vector<8x128xf32> to vector<8x32xf32>
    %419 = arith.mulf %416, %370 : vector<8x32xf32>
    %420 = arith.mulf %415, %417 : vector<8x32xf32>
    %421 = arith.addf %419, %420 : vector<8x32xf32>
    %422 = math.tanh %421 : vector<8x32xf32>
    %423 = arith.mulf %418, %422 : vector<8x32xf32>
    %c184 = arith.constant 184 : index
    %c0_141 = arith.constant 0 : index
    %424 = vector.load %arg1[%c184, %c0_141] : memref<224x128xf32, #tpu.memory_space<vmem>>, vector<32x128xf32>
    %c216 = arith.constant 216 : index
    %c0_142 = arith.constant 0 : index
    %425 = vector.load %arg1[%c216, %c0_142] : memref<224x128xf32, #tpu.memory_space<vmem>>, vector<1x128xf32>
    %cst_143 = arith.constant dense<0.000000e+00> : vector<8x128xf32>
    %426 = tpu.matmul %423, %424, %cst_143 {dimension_numbers = #tpu.dot_dimension_numbers<[1], [0], [0], [1], [0, 0, 1, 1], [], []>} : vector<8x32xf32>, vector<32x128xf32>, vector<8x128xf32> -> vector<8x128xf32>
    %427 = vector.broadcast %425 : vector<1x128xf32> to vector<8x128xf32>
    %428 = arith.addf %426, %427 : vector<8x128xf32>
    %429 = vector.extract_strided_slice %428 {offsets = [0, 0], sizes = [2, 16], strides = [1, 1]} : vector<8x128xf32> to vector<2x16xf32>
    %c0_144 = arith.constant 0 : index
    %c0_145 = arith.constant 0 : index
    %430 = vector.load %arg2[%c0_144, %c0_145] : memref<2x16xf32, #tpu.memory_space<vmem>>, vector<2x16xf32>
    tpu.vector_store %arg2[%c0_144, %c0_145], %429 {strides = array<i32>} : memref<2x16xf32, #tpu.memory_space<vmem>>, vector<2x16xf32>,
    return
  }
}

</mosaic_0001>

<llo_original>
// kernel: model_forward.1
$region0: #{model_forward.1}
  #allocation0 [shape = 'u32[]', space=smem, size = 0x4, offset = 0x4, fixed_abs, tag = 'smem constant byte address 0x4 - core index']
  #allocation1 [shape = 'u32[144,128]{1,0:T(1,128)}', space=vmem, size = 0x12000, scoped, tag = 'internal scratch']
  %s0 = inlined_call_operand.vmem [shape: s32[2,16], index: 0, kind: input, shape index: {}]
  %s1 = inlined_call_operand.hbm [shape: f32[224,128], index: 1, kind: input, shape index: {}]
  %s2 = inlined_call_operand.hbm [shape: f32[2,16], index: 2, kind: output, shape index: {}]
  %s3 = sld [smem:[#allocation0]]
  $region26: #{model_forward.1} parent=0
    _
  %s5 = ssub.s32 1, %s3
  %s6 = scalar_select 0, %s5, %s3
  $region1: #{model_forward.1} parent=0
    #allocation2 [shape = 'u8[1024]{0}', space=smem, size = 0x400, scoped, tag = 'input window, operand 0, single buffered']
    #allocation3 [shape = 's32[1]{0}', space=sflag, size = 0x4, scoped, tag = 'scoped memory for model_forward.1']
    #allocation4 [shape = 's32[1]{0}', space=sflag, size = 0x4, scoped, tag = 'scoped memory for model_forward.1']
    #allocation5 [shape = 's32[1]{0}', space=sflag, size = 0x4, scoped, tag = 'scoped memory for model_forward.1']
    #allocation6 [shape = 'u8[114688]{0}', space=vmem, size = 0x1c000, scoped, tag = 'input window, operand 1, single buffered']
    #allocation7 [shape = 'u8[1024]{0}', space=vmem, size = 0x400, scoped, tag = 'output window, operand 0, single buffered']
    %7 = vsyncpa [#allocation5], 0
    %8 = vsyncpa [#allocation3], 0
    %9 = vsyncpa [#allocation4], 0
    // Predicated region
    $region2: #{model_forward.1} parent=1 // pred_check
      _
    $region3: #{model_forward.1} parent=1 // pred_check_branch
      %11 = sbr.rel (0) target = $region5
    $region4: #{model_forward.1} parent=1 // pred_region
      %s13 = ssub.s32 32, 32
      %14 = vsyncadd [#allocation5], %s13
      %s16 = sshll.u32 %s0, 4
      %s17 = int_to_ptr.vmem [resolvable:$true] %s16
      %19 = dma.vmem_to_smem %s17, 32, [#allocation2], [#allocation5]
    $region5: #{model_forward.1} parent=1 // pred_fallthru
      _
    // Predicated region
    $region6: #{model_forward.1} parent=1 // pred_check
      _
    $region7: #{model_forward.1} parent=1 // pred_check_branch
      %21 = sbr.rel (0) target = $region9
    $region8: #{model_forward.1} parent=1 // pred_region
      %s23 = ssub.s32 3584, 3584
      %24 = vsyncadd [#allocation3], %s23
      %s25 = sshll.u32 [#allocation6], 4
      %s26 = int_to_ptr.vmem [resolvable:$true] %s25
      %31 = dma.hbm_to_vmem [thread:$0]  %s1, 3584, %s26, [#allocation3], 128, 128, 8
    $region9: #{model_forward.1} parent=1 // pred_fallthru
      _
    // Predicated region
    $region10: #{model_forward.1} parent=1 // pred_check
      _
    $region11: #{model_forward.1} parent=1 // pred_check_branch
      %33 = sbr.rel (0) target = $region13
    $region12: #{model_forward.1} parent=1 // pred_region
      %34 = dma.done [#allocation5], 32
    $region13: #{model_forward.1} parent=1 // pred_fallthru
      _
    // Predicated region
    $region14: #{model_forward.1} parent=1 // pred_check
      _
    $region15: #{model_forward.1} parent=1 // pred_check_branch
      %36 = sbr.rel (0) target = $region17
    $region16: #{model_forward.1} parent=1 // pred_region
      %37 = dma.done [#allocation3], 3584
    $region17: #{model_forward.1} parent=1 // pred_fallthru
      _
    %38 = sfence
    %v39 = vld [vmem:[#allocation6 + $0x50] sm:$0xff]
    %v40 = vld [vmem:[#allocation6 + $0x58] sm:$0xff]
    %v41 = vld [vmem:[#allocation6 + $0x60] sm:$0xff]
    %v42 = vld [vmem:[#allocation6 + $0x68] sm:$0xff]
    %v43 = vld [vmem:[#allocation6 + $0x70] sm:$0xff]
    %v44 = vld [vmem:[#allocation6 + $0x78] sm:$0xff]
    %v45 = vld [vmem:[#allocation6 + $0x80] sm:$0xff]
    %v46 = vld [vmem:[#allocation6 + $0x88] sm:$0xff]
    %v47 = vld [vmem:[#allocation6 + $0x90] sm:$0xff]
    %v48 = vld [vmem:[#allocation6 + $0x98] sm:$0xff]
    %v49 = vld [vmem:[#allocation6 + $0xa0] sm:$0xff]
    %v50 = vld [vmem:[#allocation6 + $0xa8] sm:$0xff]
    %v51 = vld [vmem:[#allocation6 + $0xb0] sm:$0x1]
    %v52 = vlaneseq
    %v53 = vshrl.u32 %v52, 7
    %v54 = vsub.s32 0, %v53
    %v55 = vrot.slane %v51, %v54
    %v56 = vlaneseq
    %v57 = vand.u32 %v56, 127
    %vm58 = vcmp.ge.s32.totalorder %v57, 64
    %vm59 = vcmp.lt.s32.totalorder %v57, 96
    %vm60 = vmand %vm58, %vm59
    %v61 = vsel %vm60, 1.0, 0.5
    %v62 = vsel %vm60, 0.0, 0.5
    %s63 = sld [smem:[#allocation2]]
    %s64 = sld [smem:[#allocation2 + $0x80]]
    %s65 = scalar_lea.vmem [#allocation6], %s63
    %v66 = vld [vmem:[%s65] sm:$0x1]
    %s67 = sadd.s32 %s64, 32
    %s68 = scalar_lea.vmem [#allocation6], %s67
    %v69 = vld [vmem:[%s68] sm:$0x1]
    %v70 = vadd.f32 %v66, %v69
    %s71 = sld [smem:[#allocation2 + $0x8]]
    %s72 = sld [smem:[#allocation2 + $0x88]]
    %s73 = scalar_lea.vmem [#allocation6], %s71
    %v74 = vld [vmem:[%s73] sm:$0x1]
    %s75 = sadd.s32 %s72, 32
    %s76 = scalar_lea.vmem [#allocation6], %s75
    %v77 = vld [vmem:[%s76] sm:$0x1]
    %v78 = vadd.f32 %v74, %v77
    %v80 = vrot.slane %v78, 7
    %vm82 = vcmask 1040384
    %v83 = vsel %vm82, %v70, %v80
    %vm84 = vcmask 1041408
    %v85 = vsel %vm84, %v83, 0.0
    %v86 = vmul.f32 %v85, %v61
    %v87 = vtanh.pop %v86
    %v88 = vmul.f32 %v87, %v61
    %v89 = vadd.f32 %v88, %v62
    %v90 = vmul.f32 %v89, 0.0
    %92 = vrot.lane.b32.xlu0 %v89, 64
    %v93 = vpop.permute.xlu0 %92
    %v95 = vmul.f32 %v89, %v93
    %97 = vrot.lane.b32.xlu0 %v95, 32
    %v98 = vpop.permute.xlu0 %97
    %v100 = vadd.f32 %v90, %v98
    %v101 = vtanh.pop %v100
    %103 = vrot.lane.b32.xlu0 %v101, 64
    %v104 = vpop.permute.xlu0 %103
    %v106 = vmul.f32 %v89, %v104
    %108 = vrot.lane.b32.xlu0 %v106, 32
    %v109 = vpop.permute.xlu0 %108
    %vm110 = vcmask 261120
    %v111 = vsel %vm110, %v109, 0
    %113 = vmatprep.subr.mxu0 0.0
    %114 = vmatpush1.msra.mxu0 0.0
    %115 = vmatprep.subr.mxu0 0.0
    %116 = vmatpush1.msra.mxu0 0.0
    %117 = vmatprep.subr.mxu0 0.0
    %118 = vmatpush1.msra.mxu0 0.0
    %119 = vmatprep.subr.mxu0 0.0
    %120 = vmatpush1.msra.mxu0 0.0
    %121 = vmatprep.subr.mxu0 0.0
    %122 = vmatpush1.msra.mxu0 0.0
    %123 = vmatprep.subr.mxu0 0.0
    %124 = vmatpush1.msra.mxu0 0.0
    %125 = vmatprep.subr.mxu0 0.0
    %126 = vmatpush1.msra.mxu0 0.0
    %127 = vmatprep.subr.mxu0 0.0
    %128 = vmatpush1.msra.mxu0 0.0
    %129 = vmatprep.subr.mxu0 0.0
    %130 = vmatpush1.msra.mxu0 0.0
    %131 = vmatprep.subr.mxu0 0.0
    %132 = vmatpush1.msra.mxu0 0.0
    %133 = vmatprep.subr.mxu0 0.0
    %134 = vmatpush1.msra.mxu0 0.0
    %135 = vmatprep.subr.mxu0 0.0
    %136 = vmatpush1.msra.mxu0 0.0
    %137 = vmatprep.subr.mxu0 0.0
    %138 = vmatpush1.msra.mxu0 %v46
    %139 = vmatprep.subr.mxu0 0.0
    %140 = vmatpush1.msra.mxu0 %v45
    %141 = vmatprep.subr.mxu0 0.0
    %142 = vmatpush1.msra.mxu0 %v44
    %143 = vmatprep.subr.mxu0 0.0
    %144 = vmatpush1.msra.mxu0 %v43
    %145 = vmatprep.subr.mxu0 0.0
    %146 = vmatpush2.msra.mxu0 0.0
    %147 = vmatprep.subr.mxu0 0.0
    %148 = vmatpush2.msra.mxu0 0.0
    %149 = vmatprep.subr.mxu0 0.0
    %150 = vmatpush2.msra.mxu0 0.0
    %151 = vmatprep.subr.mxu0 0.0
    %152 = vmatpush2.msra.mxu0 0.0
    %153 = vmatprep.subr.mxu0 0.0
    %154 = vmatpush2.msra.mxu0 0.0
    %155 = vmatprep.subr.mxu0 0.0
    %156 = vmatpush2.msra.mxu0 0.0
    %157 = vmatprep.subr.mxu0 0.0
    %158 = vmatpush2.msra.mxu0 0.0
    %159 = vmatprep.subr.mxu0 0.0
    %160 = vmatpush2.msra.mxu0 0.0
    %161 = vmatprep.subr.mxu0 0.0
    %162 = vmatpush2.msra.mxu0 0.0
    %163 = vmatprep.subr.mxu0 0.0
    %164 = vmatpush2.msra.mxu0 0.0
    %165 = vmatprep.subr.mxu0 0.0
    %166 = vmatpush2.msra.mxu0 0.0
    %167 = vmatprep.subr.mxu0 0.0
    %168 = vmatpush2.msra.mxu0 0.0
    %169 = vmatprep.subr.mxu0 0.0
    %170 = vmatpush2.msra.mxu0 0.0
    %171 = vmatprep.subr.mxu0 0.0
    %172 = vmatpush2.msra.mxu0 0.0
    %173 = vmatprep.subr.mxu0 0.0
    %174 = vmatpush2.msra.mxu0 0.0
    %175 = vmatprep.subr.mxu0 0.0
    %176 = vmatpush2.msra.mxu0 0.0
    %177 = vmatprep.mubr.f32.mxu0 0.0
    %178 = vmatmul.mubr.f32.gmra.mxu0 %v111
    %v179 = vpop.f32.mrf.mxu0
    %v180 = vadd.f32 %v55, %v179
    %v181 = vpop.f32.mrf.mxu0
    %182 = vdwg.mxu0
    %v183 = vmul.f32 %v180, %v61
    %v184 = vtanh.pop %v183
    %v185 = vmul.f32 %v184, %v61
    %v186 = vadd.f32 %v185, %v62
    %v187 = vmul.f32 %v186, 0.0
    %189 = vrot.lane.b32.xlu0 %v186, 64
    %v190 = vpop.permute.xlu0 %189
    %v192 = vmul.f32 %v186, %v190
    %194 = vrot.lane.b32.xlu0 %v192, 32
    %v195 = vpop.permute.xlu0 %194
    %v197 = vadd.f32 %v187, %v195
    %v198 = vtanh.pop %v197
    %200 = vrot.lane.b32.xlu0 %v198, 64
    %v201 = vpop.permute.xlu0 %200
    %v203 = vmul.f32 %v186, %v201
    %205 = vrot.lane.b32.xlu0 %v203, 32
    %v206 = vpop.permute.xlu0 %205
    %v207 = vsel %vm110, %v206, 0
    %209 = vmatprep.subr.mxu0 0.0
    %210 = vmatpush1.msra.mxu0 0.0
    %211 = vmatprep.subr.mxu0 0.0
    %212 = vmatpush1.msra.mxu0 0.0
    %213 = vmatprep.subr.mxu0 0.0
    %214 = vmatpush1.msra.mxu0 0.0
    %215 = vmatprep.subr.mxu0 0.0
    %216 = vmatpush1.msra.mxu0 0.0
    %217 = vmatprep.subr.mxu0 0.0
    %218 = vmatpush1.msra.mxu0 0.0
    %219 = vmatprep.subr.mxu0 0.0
    %220 = vmatpush1.msra.mxu0 0.0
    %221 = vmatprep.subr.mxu0 0.0
    %222 = vmatpush1.msra.mxu0 0.0
    %223 = vmatprep.subr.mxu0 0.0
    %224 = vmatpush1.msra.mxu0 0.0
    %225 = vmatprep.subr.mxu0 0.0
    %226 = vmatpush1.msra.mxu0 0.0
    %227 = vmatprep.subr.mxu0 0.0
    %228 = vmatpush1.msra.mxu0 0.0
    %229 = vmatprep.subr.mxu0 0.0
    %230 = vmatpush1.msra.mxu0 0.0
    %231 = vmatprep.subr.mxu0 0.0
    %232 = vmatpush1.msra.mxu0 0.0
    %233 = vmatprep.subr.mxu0 0.0
    %234 = vmatpush1.msra.mxu0 %v50
    %235 = vmatprep.subr.mxu0 0.0
    %236 = vmatpush1.msra.mxu0 %v49
    %237 = vmatprep.subr.mxu0 0.0
    %238 = vmatpush1.msra.mxu0 %v48
    %239 = vmatprep.subr.mxu0 0.0
    %240 = vmatpush1.msra.mxu0 %v47
    %241 = vmatprep.subr.mxu0 0.0
    %242 = vmatpush2.msra.mxu0 0.0
    %243 = vmatprep.subr.mxu0 0.0
    %244 = vmatpush2.msra.mxu0 0.0
    %245 = vmatprep.subr.mxu0 0.0
    %246 = vmatpush2.msra.mxu0 0.0
    %247 = vmatprep.subr.mxu0 0.0
    %248 = vmatpush2.msra.mxu0 0.0
    %249 = vmatprep.subr.mxu0 0.0
    %250 = vmatpush2.msra.mxu0 0.0
    %251 = vmatprep.subr.mxu0 0.0
    %252 = vmatpush2.msra.mxu0 0.0
    %253 = vmatprep.subr.mxu0 0.0
    %254 = vmatpush2.msra.mxu0 0.0
    %255 = vmatprep.subr.mxu0 0.0
    %256 = vmatpush2.msra.mxu0 0.0
    %257 = vmatprep.subr.mxu0 0.0
    %258 = vmatpush2.msra.mxu0 0.0
    %259 = vmatprep.subr.mxu0 0.0
    %260 = vmatpush2.msra.mxu0 0.0
    %261 = vmatprep.subr.mxu0 0.0
    %262 = vmatpush2.msra.mxu0 0.0
    %263 = vmatprep.subr.mxu0 0.0
    %264 = vmatpush2.msra.mxu0 0.0
    %265 = vmatprep.subr.mxu0 0.0
    %266 = vmatpush2.msra.mxu0 0.0
    %267 = vmatprep.subr.mxu0 0.0
    %268 = vmatpush2.msra.mxu0 0.0
    %269 = vmatprep.subr.mxu0 0.0
    %270 = vmatpush2.msra.mxu0 0.0
    %271 = vmatprep.subr.mxu0 0.0
    %272 = vmatpush2.msra.mxu0 0.0
    %273 = vmatprep.mubr.f32.mxu0 0.0
    %274 = vmatmul.mubr.f32.gmra.mxu0 %v207
    %v275 = vpop.f32.mrf.mxu0
    %v276 = vadd.f32 %v55, %v275
    %v277 = vpop.f32.mrf.mxu0
    %278 = vdwg.mxu0
    %s279 = sld [smem:[#allocation2 + $0x1]]
    %s280 = sld [smem:[#allocation2 + $0x81]]
    %s281 = scalar_lea.vmem [#allocation6], %s279
    %v282 = vld [vmem:[%s281] sm:$0x1]
    %s283 = sadd.s32 %s280, 32
    %s284 = scalar_lea.vmem [#allocation6], %s283
    %v285 = vld [vmem:[%s284] sm:$0x1]
    %v286 = vadd.f32 %v282, %v285
    %s287 = sld [smem:[#allocation2 + $0x9]]
    %s288 = sld [smem:[#allocation2 + $0x89]]
    %s289 = scalar_lea.vmem [#allocation6], %s287
    %v290 = vld [vmem:[%s289] sm:$0x1]
    %s291 = sadd.s32 %s288, 32
    %s292 = scalar_lea.vmem [#allocation6], %s291
    %v293 = vld [vmem:[%s292] sm:$0x1]
    %v294 = vadd.f32 %v290, %v293
    %v296 = vrot.slane %v294, 7
    %v298 = vsel %vm82, %v286, %v296
    %v299 = vsel %vm84, %v298, 0.0
    %300 = vmatprep.subr.mxu0 0.0
    %301 = vmatpush1.msra.mxu0 0.0
    %302 = vmatprep.subr.mxu0 0.0
    %303 = vmatpush1.msra.mxu0 0.0
    %304 = vmatprep.subr.mxu0 0.0
    %305 = vmatpush1.msra.mxu0 0.0
    %306 = vmatprep.subr.mxu0 0.0
    %307 = vmatpush1.msra.mxu0 0.0
    %308 = vmatprep.subr.mxu0 0.0
    %309 = vmatpush1.msra.mxu0 0.0
    %310 = vmatprep.subr.mxu0 0.0
    %311 = vmatpush1.msra.mxu0 0.0
    %312 = vmatprep.subr.mxu0 0.0
    %313 = vmatpush1.msra.mxu0 0.0
    %314 = vmatprep.subr.mxu0 0.0
    %315 = vmatpush1.msra.mxu0 0.0
    %316 = vmatprep.subr.mxu0 0.0
    %317 = vmatpush1.msra.mxu0 0.0
    %318 = vmatprep.subr.mxu0 0.0
    %319 = vmatpush1.msra.mxu0 0.0
    %320 = vmatprep.subr.mxu0 0.0
    %321 = vmatpush1.msra.mxu0 0.0
    %322 = vmatprep.subr.mxu0 0.0
    %323 = vmatpush1.msra.mxu0 0.0
    %324 = vmatprep.subr.mxu0 0.0
    %325 = vmatpush1.msra.mxu0 %v42
    %326 = vmatprep.subr.mxu0 0.0
    %327 = vmatpush1.msra.mxu0 %v41
    %328 = vmatprep.subr.mxu0 0.0
    %329 = vmatpush1.msra.mxu0 %v40
    %330 = vmatprep.subr.mxu0 0.0
    %331 = vmatpush1.msra.mxu0 %v39
    %332 = vmatprep.subr.mxu0 0.0
    %333 = vmatpush2.msra.mxu0 0.0
    %334 = vmatprep.subr.mxu0 0.0
    %335 = vmatpush2.msra.mxu0 0.0
    %336 = vmatprep.subr.mxu0 0.0
    %337 = vmatpush2.msra.mxu0 0.0
    %338 = vmatprep.subr.mxu0 0.0
    %339 = vmatpush2.msra.mxu0 0.0
    %340 = vmatprep.subr.mxu0 0.0
    %341 = vmatpush2.msra.mxu0 0.0
    %342 = vmatprep.subr.mxu0 0.0
    %343 = vmatpush2.msra.mxu0 0.0
    %344 = vmatprep.subr.mxu0 0.0
    %345 = vmatpush2.msra.mxu0 0.0
    %346 = vmatprep.subr.mxu0 0.0
    %347 = vmatpush2.msra.mxu0 0.0
    %348 = vmatprep.subr.mxu0 0.0
    %349 = vmatpush2.msra.mxu0 0.0
    %350 = vmatprep.subr.mxu0 0.0
    %351 = vmatpush2.msra.mxu0 0.0
    %352 = vmatprep.subr.mxu0 0.0
    %353 = vmatpush2.msra.mxu0 0.0
    %354 = vmatprep.subr.mxu0 0.0
    %355 = vmatpush2.msra.mxu0 0.0
    %356 = vmatprep.subr.mxu0 0.0
    %357 = vmatpush2.msra.mxu0 0.0
    %358 = vmatprep.subr.mxu0 0.0
    %359 = vmatpush2.msra.mxu0 0.0
    %360 = vmatprep.subr.mxu0 0.0
    %361 = vmatpush2.msra.mxu0 0.0
    %362 = vmatprep.subr.mxu0 0.0
    %363 = vmatpush2.msra.mxu0 0.0
    %364 = vmatprep.mubr.f32.mxu0 0.0
    %365 = vmatmul.mubr.f32.gmra.mxu0 %v111
    %v366 = vpop.f32.mrf.mxu0
    %v367 = vadd.f32 0.0, %v366
    %v368 = vpop.f32.mrf.mxu0
    %369 = vdwg.mxu0
    %v370 = vadd.f32 %v299, %v367
    %v371 = vmul.f32 %v370, %v61
    %v372 = vtanh.pop %v371
    %v373 = vmul.f32 %v372, %v61
    %v374 = vadd.f32 %v373, %v62
    %v375 = vmul.f32 %v374, %v100
    %377 = vrot.lane.b32.xlu0 %v374, 64
    %v378 = vpop.permute.xlu0 %377
    %v380 = vmul.f32 %v374, %v378
    %382 = vrot.lane.b32.xlu0 %v380, 32
    %v383 = vpop.permute.xlu0 %382
    %v385 = vadd.f32 %v375, %v383
    %v386 = vtanh.pop %v385
    %388 = vrot.lane.b32.xlu0 %v386, 64
    %v389 = vpop.permute.xlu0 %388
    %v391 = vmul.f32 %v374, %v389
    %393 = vrot.lane.b32.xlu0 %v391, 32
    %v394 = vpop.permute.xlu0 %393
    %v395 = vsel %vm110, %v394, 0
    %397 = vmatprep.subr.mxu0 0.0
    %398 = vmatpush1.msra.mxu0 0.0
    %399 = vmatprep.subr.mxu0 0.0
    %400 = vmatpush1.msra.mxu0 0.0
    %401 = vmatprep.subr.mxu0 0.0
    %402 = vmatpush1.msra.mxu0 0.0
    %403 = vmatprep.subr.mxu0 0.0
    %404 = vmatpush1.msra.mxu0 0.0
    %405 = vmatprep.subr.mxu0 0.0
    %406 = vmatpush1.msra.mxu0 0.0
    %407 = vmatprep.subr.mxu0 0.0
    %408 = vmatpush1.msra.mxu0 0.0
    %409 = vmatprep.subr.mxu0 0.0
    %410 = vmatpush1.msra.mxu0 0.0
    %411 = vmatprep.subr.mxu0 0.0
    %412 = vmatpush1.msra.mxu0 0.0
    %413 = vmatprep.subr.mxu0 0.0
    %414 = vmatpush1.msra.mxu0 0.0
    %415 = vmatprep.subr.mxu0 0.0
    %416 = vmatpush1.msra.mxu0 0.0
    %417 = vmatprep.subr.mxu0 0.0
    %418 = vmatpush1.msra.mxu0 0.0
    %419 = vmatprep.subr.mxu0 0.0
    %420 = vmatpush1.msra.mxu0 0.0
    %421 = vmatprep.subr.mxu0 0.0
    %422 = vmatpush1.msra.mxu0 %v46
    %423 = vmatprep.subr.mxu0 0.0
    %424 = vmatpush1.msra.mxu0 %v45
    %425 = vmatprep.subr.mxu0 0.0
    %426 = vmatpush1.msra.mxu0 %v44
    %427 = vmatprep.subr.mxu0 0.0
    %428 = vmatpush1.msra.mxu0 %v43
    %429 = vmatprep.subr.mxu0 0.0
    %430 = vmatpush2.msra.mxu0 0.0
    %431 = vmatprep.subr.mxu0 0.0
    %432 = vmatpush2.msra.mxu0 0.0
    %433 = vmatprep.subr.mxu0 0.0
    %434 = vmatpush2.msra.mxu0 0.0
    %435 = vmatprep.subr.mxu0 0.0
    %436 = vmatpush2.msra.mxu0 0.0
    %437 = vmatprep.subr.mxu0 0.0
    %438 = vmatpush2.msra.mxu0 0.0
    %439 = vmatprep.subr.mxu0 0.0
    %440 = vmatpush2.msra.mxu0 0.0
    %441 = vmatprep.subr.mxu0 0.0
    %442 = vmatpush2.msra.mxu0 0.0
    %443 = vmatprep.subr.mxu0 0.0
    %444 = vmatpush2.msra.mxu0 0.0
    %445 = vmatprep.subr.mxu0 0.0
    %446 = vmatpush2.msra.mxu0 0.0
    %447 = vmatprep.subr.mxu0 0.0
    %448 = vmatpush2.msra.mxu0 0.0
    %449 = vmatprep.subr.mxu0 0.0
    %450 = vmatpush2.msra.mxu0 0.0
    %451 = vmatprep.subr.mxu0 0.0
    %452 = vmatpush2.msra.mxu0 0.0
    %453 = vmatprep.subr.mxu0 0.0
    %454 = vmatpush2.msra.mxu0 0.0
    %455 = vmatprep.subr.mxu0 0.0
    %456 = vmatpush2.msra.mxu0 0.0
    %457 = vmatprep.subr.mxu0 0.0
    %458 = vmatpush2.msra.mxu0 0.0
    %459 = vmatprep.subr.mxu0 0.0
    %460 = vmatpush2.msra.mxu0 0.0
    %461 = vmatprep.mubr.f32.mxu0 0.0
    %462 = vmatmul.mubr.f32.gmra.mxu0 %v395
    %v463 = vpop.f32.mrf.mxu0
    %v464 = vadd.f32 %v276, %v463
    %v465 = vpop.f32.mrf.mxu0
    %466 = vdwg.mxu0
    %v467 = vmul.f32 %v464, %v61
    %v468 = vtanh.pop %v467
    %v469 = vmul.f32 %v468, %v61
    %v470 = vadd.f32 %v469, %v62
    %v471 = vmul.f32 %v470, %v197
    %473 = vrot.lane.b32.xlu0 %v470, 64
    %v474 = vpop.permute.xlu0 %473
    %v476 = vmul.f32 %v470, %v474
    %478 = vrot.lane.b32.xlu0 %v476, 32
    %v479 = vpop.permute.xlu0 %478
    %v481 = vadd.f32 %v471, %v479
    %v482 = vtanh.pop %v481
    %484 = vrot.lane.b32.xlu0 %v482, 64
    %v485 = vpop.permute.xlu0 %484
    %v487 = vmul.f32 %v470, %v485
    %489 = vrot.lane.b32.xlu0 %v487, 32
    %v490 = vpop.permute.xlu0 %489
    %v491 = vsel %vm110, %v490, 0
    %493 = vmatprep.subr.mxu0 0.0
    %494 = vmatpush1.msra.mxu0 0.0
    %495 = vmatprep.subr.mxu0 0.0
    %496 = vmatpush1.msra.mxu0 0.0
    %497 = vmatprep.subr.mxu0 0.0
    %498 = vmatpush1.msra.mxu0 0.0
    %499 = vmatprep.subr.mxu0 0.0
    %500 = vmatpush1.msra.mxu0 0.0
    %501 = vmatprep.subr.mxu0 0.0
    %502 = vmatpush1.msra.mxu0 0.0
    %503 = vmatprep.subr.mxu0 0.0
    %504 = vmatpush1.msra.mxu0 0.0
    %505 = vmatprep.subr.mxu0 0.0
    %506 = vmatpush1.msra.mxu0 0.0
    %507 = vmatprep.subr.mxu0 0.0
    %508 = vmatpush1.msra.mxu0 0.0
    %509 = vmatprep.subr.mxu0 0.0
    %510 = vmatpush1.msra.mxu0 0.0
    %511 = vmatprep.subr.mxu0 0.0
    %512 = vmatpush1.msra.mxu0 0.0
    %513 = vmatprep.subr.mxu0 0.0
    %514 = vmatpush1.msra.mxu0 0.0
    %515 = vmatprep.subr.mxu0 0.0
    %516 = vmatpush1.msra.mxu0 0.0
    %517 = vmatprep.subr.mxu0 0.0
    %518 = vmatpush1.msra.mxu0 %v50
    %519 = vmatprep.subr.mxu0 0.0
    %520 = vmatpush1.msra.mxu0 %v49
    %521 = vmatprep.subr.mxu0 0.0
    %522 = vmatpush1.msra.mxu0 %v48
    %523 = vmatprep.subr.mxu0 0.0
    %524 = vmatpush1.msra.mxu0 %v47
    %525 = vmatprep.subr.mxu0 0.0
    %526 = vmatpush2.msra.mxu0 0.0
    %527 = vmatprep.subr.mxu0 0.0
    %528 = vmatpush2.msra.mxu0 0.0
    %529 = vmatprep.subr.mxu0 0.0
    %530 = vmatpush2.msra.mxu0 0.0
    %531 = vmatprep.subr.mxu0 0.0
    %532 = vmatpush2.msra.mxu0 0.0
    %533 = vmatprep.subr.mxu0 0.0
    %534 = vmatpush2.msra.mxu0 0.0
    %535 = vmatprep.subr.mxu0 0.0
    %536 = vmatpush2.msra.mxu0 0.0
    %537 = vmatprep.subr.mxu0 0.0
    %538 = vmatpush2.msra.mxu0 0.0
    %539 = vmatprep.subr.mxu0 0.0
    %540 = vmatpush2.msra.mxu0 0.0
    %541 = vmatprep.subr.mxu0 0.0
    %542 = vmatpush2.msra.mxu0 0.0
    %543 = vmatprep.subr.mxu0 0.0
    %544 = vmatpush2.msra.mxu0 0.0
    %545 = vmatprep.subr.mxu0 0.0
    %546 = vmatpush2.msra.mxu0 0.0
    %547 = vmatprep.subr.mxu0 0.0
    %548 = vmatpush2.msra.mxu0 0.0
    %549 = vmatprep.subr.mxu0 0.0
    %550 = vmatpush2.msra.mxu0 0.0
    %551 = vmatprep.subr.mxu0 0.0
    %552 = vmatpush2.msra.mxu0 0.0
    %553 = vmatprep.subr.mxu0 0.0
    %554 = vmatpush2.msra.mxu0 0.0
    %555 = vmatprep.subr.mxu0 0.0
    %556 = vmatpush2.msra.mxu0 0.0
    %557 = vmatprep.mubr.f32.mxu0 0.0
    %558 = vmatmul.mubr.f32.gmra.mxu0 %v491
    %v559 = vpop.f32.mrf.mxu0
    %v560 = vadd.f32 %v55, %v559
    %v561 = vpop.f32.mrf.mxu0
    %562 = vdwg.mxu0
    %s563 = sld [smem:[#allocation2 + $0x2]]
    %s564 = sld [smem:[#allocation2 + $0x82]]
    %s565 = scalar_lea.vmem [#allocation6], %s563
    %v566 = vld [vmem:[%s565] sm:$0x1]
    %s567 = sadd.s32 %s564, 32
    %s568 = scalar_lea.vmem [#allocation6], %s567
    %v569 = vld [vmem:[%s568] sm:$0x1]
    %v570 = vadd.f32 %v566, %v569
    %s571 = sld [smem:[#allocation2 + $0xa]]
    %s572 = sld [smem:[#allocation2 + $0x8a]]
    %s573 = scalar_lea.vmem [#allocation6], %s571
    %v574 = vld [vmem:[%s573] sm:$0x1]
    %s575 = sadd.s32 %s572, 32
    %s576 = scalar_lea.vmem [#allocation6], %s575
    %v577 = vld [vmem:[%s576] sm:$0x1]
    %v578 = vadd.f32 %v574, %v577
    %v580 = vrot.slane %v578, 7
    %v582 = vsel %vm82, %v570, %v580
    %v583 = vsel %vm84, %v582, 0.0
    %584 = vmatprep.subr.mxu0 0.0
    %585 = vmatpush1.msra.mxu0 0.0
    %586 = vmatprep.subr.mxu0 0.0
    %587 = vmatpush1.msra.mxu0 0.0
    %588 = vmatprep.subr.mxu0 0.0
    %589 = vmatpush1.msra.mxu0 0.0
    %590 = vmatprep.subr.mxu0 0.0
    %591 = vmatpush1.msra.mxu0 0.0
    %592 = vmatprep.subr.mxu0 0.0
    %593 = vmatpush1.msra.mxu0 0.0
    %594 = vmatprep.subr.mxu0 0.0
    %595 = vmatpush1.msra.mxu0 0.0
    %596 = vmatprep.subr.mxu0 0.0
    %597 = vmatpush1.msra.mxu0 0.0
    %598 = vmatprep.subr.mxu0 0.0
    %599 = vmatpush1.msra.mxu0 0.0
    %600 = vmatprep.subr.mxu0 0.0
    %601 = vmatpush1.msra.mxu0 0.0
    %602 = vmatprep.subr.mxu0 0.0
    %603 = vmatpush1.msra.mxu0 0.0
    %604 = vmatprep.subr.mxu0 0.0
    %605 = vmatpush1.msra.mxu0 0.0
    %606 = vmatprep.subr.mxu0 0.0
    %607 = vmatpush1.msra.mxu0 0.0
    %608 = vmatprep.subr.mxu0 0.0
    %609 = vmatpush1.msra.mxu0 %v42
    %610 = vmatprep.subr.mxu0 0.0
    %611 = vmatpush1.msra.mxu0 %v41
    %612 = vmatprep.subr.mxu0 0.0
    %613 = vmatpush1.msra.mxu0 %v40
    %614 = vmatprep.subr.mxu0 0.0
    %615 = vmatpush1.msra.mxu0 %v39
    %616 = vmatprep.subr.mxu0 0.0
    %617 = vmatpush2.msra.mxu0 0.0
    %618 = vmatprep.subr.mxu0 0.0
    %619 = vmatpush2.msra.mxu0 0.0
    %620 = vmatprep.subr.mxu0 0.0
    %621 = vmatpush2.msra.mxu0 0.0
    %622 = vmatprep.subr.mxu0 0.0
    %623 = vmatpush2.msra.mxu0 0.0
    %624 = vmatprep.subr.mxu0 0.0
    %625 = vmatpush2.msra.mxu0 0.0
    %626 = vmatprep.subr.mxu0 0.0
    %627 = vmatpush2.msra.mxu0 0.0
    %628 = vmatprep.subr.mxu0 0.0
    %629 = vmatpush2.msra.mxu0 0.0
    %630 = vmatprep.subr.mxu0 0.0
    %631 = vmatpush2.msra.mxu0 0.0
    %632 = vmatprep.subr.mxu0 0.0
    %633 = vmatpush2.msra.mxu0 0.0
    %634 = vmatprep.subr.mxu0 0.0
    %635 = vmatpush2.msra.mxu0 0.0
    %636 = vmatprep.subr.mxu0 0.0
    %637 = vmatpush2.msra.mxu0 0.0
    %638 = vmatprep.subr.mxu0 0.0
    %639 = vmatpush2.msra.mxu0 0.0
    %640 = vmatprep.subr.mxu0 0.0
    %641 = vmatpush2.msra.mxu0 0.0
    %642 = vmatprep.subr.mxu0 0.0
    %643 = vmatpush2.msra.mxu0 0.0
    %644 = vmatprep.subr.mxu0 0.0
    %645 = vmatpush2.msra.mxu0 0.0
    %646 = vmatprep.subr.mxu0 0.0
    %647 = vmatpush2.msra.mxu0 0.0
    %648 = vmatprep.mubr.f32.mxu0 0.0
    %649 = vmatmul.mubr.f32.gmra.mxu0 %v395
    %v650 = vpop.f32.mrf.mxu0
    %v651 = vadd.f32 0.0, %v650
    %v652 = vpop.f32.mrf.mxu0
    %653 = vdwg.mxu0
    %v654 = vadd.f32 %v583, %v651
    %v655 = vmul.f32 %v654, %v61
    %v656 = vtanh.pop %v655
    %v657 = vmul.f32 %v656, %v61
    %v658 = vadd.f32 %v657, %v62
    %v659 = vmul.f32 %v658, %v385
    %661 = vrot.lane.b32.xlu0 %v658, 64
    %v662 = vpop.permute.xlu0 %661
    %v664 = vmul.f32 %v658, %v662
    %666 = vrot.lane.b32.xlu0 %v664, 32
    %v667 = vpop.permute.xlu0 %666
    %v669 = vadd.f32 %v659, %v667
    %v670 = vtanh.pop %v669
    %672 = vrot.lane.b32.xlu0 %v670, 64
    %v673 = vpop.permute.xlu0 %672
    %v675 = vmul.f32 %v658, %v673
    %677 = vrot.lane.b32.xlu0 %v675, 32
    %v678 = vpop.permute.xlu0 %677
    %v679 = vsel %vm110, %v678, 0
    %681 = vmatprep.subr.mxu0 0.0
    %682 = vmatpush1.msra.mxu0 0.0
    %683 = vmatprep.subr.mxu0 0.0
    %684 = vmatpush1.msra.mxu0 0.0
    %685 = vmatprep.subr.mxu0 0.0
    %686 = vmatpush1.msra.mxu0 0.0
    %687 = vmatprep.subr.mxu0 0.0
    %688 = vmatpush1.msra.mxu0 0.0
    %689 = vmatprep.subr.mxu0 0.0
    %690 = vmatpush1.msra.mxu0 0.0
    %691 = vmatprep.subr.mxu0 0.0
    %692 = vmatpush1.msra.mxu0 0.0
    %693 = vmatprep.subr.mxu0 0.0
    %694 = vmatpush1.msra.mxu0 0.0
    %695 = vmatprep.subr.mxu0 0.0
    %696 = vmatpush1.msra.mxu0 0.0
    %697 = vmatprep.subr.mxu0 0.0
    %698 = vmatpush1.msra.mxu0 0.0
    %699 = vmatprep.subr.mxu0 0.0
    %700 = vmatpush1.msra.mxu0 0.0
    %701 = vmatprep.subr.mxu0 0.0
    %702 = vmatpush1.msra.mxu0 0.0
    %703 = vmatprep.subr.mxu0 0.0
    %704 = vmatpush1.msra.mxu0 0.0
    %705 = vmatprep.subr.mxu0 0.0
    %706 = vmatpush1.msra.mxu0 %v46
    %707 = vmatprep.subr.mxu0 0.0
    %708 = vmatpush1.msra.mxu0 %v45
    %709 = vmatprep.subr.mxu0 0.0
    %710 = vmatpush1.msra.mxu0 %v44
    %711 = vmatprep.subr.mxu0 0.0
    %712 = vmatpush1.msra.mxu0 %v43
    %713 = vmatprep.subr.mxu0 0.0
    %714 = vmatpush2.msra.mxu0 0.0
    %715 = vmatprep.subr.mxu0 0.0
    %716 = vmatpush2.msra.mxu0 0.0
    %717 = vmatprep.subr.mxu0 0.0
    %718 = vmatpush2.msra.mxu0 0.0
    %719 = vmatprep.subr.mxu0 0.0
    %720 = vmatpush2.msra.mxu0 0.0
    %721 = vmatprep.subr.mxu0 0.0
    %722 = vmatpush2.msra.mxu0 0.0
    %723 = vmatprep.subr.mxu0 0.0
    %724 = vmatpush2.msra.mxu0 0.0
    %725 = vmatprep.subr.mxu0 0.0
    %726 = vmatpush2.msra.mxu0 0.0
    %727 = vmatprep.subr.mxu0 0.0
    %728 = vmatpush2.msra.mxu0 0.0
    %729 = vmatprep.subr.mxu0 0.0
    %730 = vmatpush2.msra.mxu0 0.0
    %731 = vmatprep.subr.mxu0 0.0
    %732 = vmatpush2.msra.mxu0 0.0
    %733 = vmatprep.subr.mxu0 0.0
    %734 = vmatpush2.msra.mxu0 0.0
    %735 = vmatprep.subr.mxu0 0.0
    %736 = vmatpush2.msra.mxu0 0.0
    %737 = vmatprep.subr.mxu0 0.0
    %738 = vmatpush2.msra.mxu0 0.0
    %739 = vmatprep.subr.mxu0 0.0
    %740 = vmatpush2.msra.mxu0 0.0
    %741 = vmatprep.subr.mxu0 0.0
    %742 = vmatpush2.msra.mxu0 0.0
    %743 = vmatprep.subr.mxu0 0.0
    %744 = vmatpush2.msra.mxu0 0.0
    %745 = vmatprep.mubr.f32.mxu0 0.0
    %746 = vmatmul.mubr.f32.gmra.mxu0 %v679
    %v747 = vpop.f32.mrf.mxu0
    %v748 = vadd.f32 %v560, %v747
    %v749 = vpop.f32.mrf.mxu0
    %750 = vdwg.mxu0
    %v751 = vmul.f32 %v748, %v61
    %v752 = vtanh.pop %v751
    %v753 = vmul.f32 %v752, %v61
    %v754 = vadd.f32 %v753, %v62
    %v755 = vmul.f32 %v754, %v481
    %757 = vrot.lane.b32.xlu0 %v754, 64
    %v758 = vpop.permute.xlu0 %757
    %v760 = vmul.f32 %v754, %v758
    %762 = vrot.lane.b32.xlu0 %v760, 32
    %v763 = vpop.permute.xlu0 %762
    %v765 = vadd.f32 %v755, %v763
    %v766 = vtanh.pop %v765
    %768 = vrot.lane.b32.xlu0 %v766, 64
    %v769 = vpop.permute.xlu0 %768
    %v771 = vmul.f32 %v754, %v769
    %773 = vrot.lane.b32.xlu0 %v771, 32
    %v774 = vpop.permute.xlu0 %773
    %v775 = vsel %vm110, %v774, 0
    %777 = vmatprep.subr.mxu0 0.0
    %778 = vmatpush1.msra.mxu0 0.0
    %779 = vmatprep.subr.mxu0 0.0
    %780 = vmatpush1.msra.mxu0 0.0
    %781 = vmatprep.subr.mxu0 0.0
    %782 = vmatpush1.msra.mxu0 0.0
    %783 = vmatprep.subr.mxu0 0.0
    %784 = vmatpush1.msra.mxu0 0.0
    %785 = vmatprep.subr.mxu0 0.0
    %786 = vmatpush1.msra.mxu0 0.0
    %787 = vmatprep.subr.mxu0 0.0
    %788 = vmatpush1.msra.mxu0 0.0
    %789 = vmatprep.subr.mxu0 0.0
    %790 = vmatpush1.msra.mxu0 0.0
    %791 = vmatprep.subr.mxu0 0.0
    %792 = vmatpush1.msra.mxu0 0.0
    %793 = vmatprep.subr.mxu0 0.0
    %794 = vmatpush1.msra.mxu0 0.0
    %795 = vmatprep.subr.mxu0 0.0
    %796 = vmatpush1.msra.mxu0 0.0
    %797 = vmatprep.subr.mxu0 0.0
    %798 = vmatpush1.msra.mxu0 0.0
    %799 = vmatprep.subr.mxu0 0.0
    %800 = vmatpush1.msra.mxu0 0.0
    %801 = vmatprep.subr.mxu0 0.0
    %802 = vmatpush1.msra.mxu0 %v50
    %803 = vmatprep.subr.mxu0 0.0
    %804 = vmatpush1.msra.mxu0 %v49
    %805 = vmatprep.subr.mxu0 0.0
    %806 = vmatpush1.msra.mxu0 %v48
    %807 = vmatprep.subr.mxu0 0.0
    %808 = vmatpush1.msra.mxu0 %v47
    %809 = vmatprep.subr.mxu0 0.0
    %810 = vmatpush2.msra.mxu0 0.0
    %811 = vmatprep.subr.mxu0 0.0
    %812 = vmatpush2.msra.mxu0 0.0
    %813 = vmatprep.subr.mxu0 0.0
    %814 = vmatpush2.msra.mxu0 0.0
    %815 = vmatprep.subr.mxu0 0.0
    %816 = vmatpush2.msra.mxu0 0.0
    %817 = vmatprep.subr.mxu0 0.0
    %818 = vmatpush2.msra.mxu0 0.0
    %819 = vmatprep.subr.mxu0 0.0
    %820 = vmatpush2.msra.mxu0 0.0
    %821 = vmatprep.subr.mxu0 0.0
    %822 = vmatpush2.msra.mxu0 0.0
    %823 = vmatprep.subr.mxu0 0.0
    %824 = vmatpush2.msra.mxu0 0.0
    %825 = vmatprep.subr.mxu0 0.0
    %826 = vmatpush2.msra.mxu0 0.0
    %827 = vmatprep.subr.mxu0 0.0
    %828 = vmatpush2.msra.mxu0 0.0
    %829 = vmatprep.subr.mxu0 0.0
    %830 = vmatpush2.msra.mxu0 0.0
    %831 = vmatprep.subr.mxu0 0.0
    %832 = vmatpush2.msra.mxu0 0.0
    %833 = vmatprep.subr.mxu0 0.0
    %834 = vmatpush2.msra.mxu0 0.0
    %835 = vmatprep.subr.mxu0 0.0
    %836 = vmatpush2.msra.mxu0 0.0
    %837 = vmatprep.subr.mxu0 0.0
    %838 = vmatpush2.msra.mxu0 0.0
    %839 = vmatprep.subr.mxu0 0.0
    %840 = vmatpush2.msra.mxu0 0.0
    %841 = vmatprep.mubr.f32.mxu0 0.0
    %842 = vmatmul.mubr.f32.gmra.mxu0 %v775
    %v843 = vpop.f32.mrf.mxu0
    %v844 = vadd.f32 %v55, %v843
    %v845 = vpop.f32.mrf.mxu0
    %846 = vdwg.mxu0
    %s847 = sld [smem:[#allocation2 + $0x3]]
    %s848 = sld [smem:[#allocation2 + $0x83]]
    %s849 = scalar_lea.vmem [#allocation6], %s847
    %v850 = vld [vmem:[%s849] sm:$0x1]
    %s851 = sadd.s32 %s848, 32
    %s852 = scalar_lea.vmem [#allocation6], %s851
    %v853 = vld [vmem:[%s852] sm:$0x1]
    %v854 = vadd.f32 %v850, %v853
    %s855 = sld [smem:[#allocation2 + $0xb]]
    %s856 = sld [smem:[#allocation2 + $0x8b]]
    %s857 = scalar_lea.vmem [#allocation6], %s855
    %v858 = vld [vmem:[%s857] sm:$0x1]
    %s859 = sadd.s32 %s856, 32
    %s860 = scalar_lea.vmem [#allocation6], %s859
    %v861 = vld [vmem:[%s860] sm:$0x1]
    %v862 = vadd.f32 %v858, %v861
    %v864 = vrot.slane %v862, 7
    %v866 = vsel %vm82, %v854, %v864
    %v867 = vsel %vm84, %v866, 0.0
    %868 = vmatprep.subr.mxu0 0.0
    %869 = vmatpush1.msra.mxu0 0.0
    %870 = vmatprep.subr.mxu0 0.0
    %871 = vmatpush1.msra.mxu0 0.0
    %872 = vmatprep.subr.mxu0 0.0
    %873 = vmatpush1.msra.mxu0 0.0
    %874 = vmatprep.subr.mxu0 0.0
    %875 = vmatpush1.msra.mxu0 0.0
    %876 = vmatprep.subr.mxu0 0.0
    %877 = vmatpush1.msra.mxu0 0.0
    %878 = vmatprep.subr.mxu0 0.0
    %879 = vmatpush1.msra.mxu0 0.0
    %880 = vmatprep.subr.mxu0 0.0
    %881 = vmatpush1.msra.mxu0 0.0
    %882 = vmatprep.subr.mxu0 0.0
    %883 = vmatpush1.msra.mxu0 0.0
    %884 = vmatprep.subr.mxu0 0.0
    %885 = vmatpush1.msra.mxu0 0.0
    %886 = vmatprep.subr.mxu0 0.0
    %887 = vmatpush1.msra.mxu0 0.0
    %888 = vmatprep.subr.mxu0 0.0
    %889 = vmatpush1.msra.mxu0 0.0
    %890 = vmatprep.subr.mxu0 0.0
    %891 = vmatpush1.msra.mxu0 0.0
    %892 = vmatprep.subr.mxu0 0.0
    %893 = vmatpush1.msra.mxu0 %v42
    %894 = vmatprep.subr.mxu0 0.0
    %895 = vmatpush1.msra.mxu0 %v41
    %896 = vmatprep.subr.mxu0 0.0
    %897 = vmatpush1.msra.mxu0 %v40
    %898 = vmatprep.subr.mxu0 0.0
    %899 = vmatpush1.msra.mxu0 %v39
    %900 = vmatprep.subr.mxu0 0.0
    %901 = vmatpush2.msra.mxu0 0.0
    %902 = vmatprep.subr.mxu0 0.0
    %903 = vmatpush2.msra.mxu0 0.0
    %904 = vmatprep.subr.mxu0 0.0
    %905 = vmatpush2.msra.mxu0 0.0
    %906 = vmatprep.subr.mxu0 0.0
    %907 = vmatpush2.msra.mxu0 0.0
    %908 = vmatprep.subr.mxu0 0.0
    %909 = vmatpush2.msra.mxu0 0.0
    %910 = vmatprep.subr.mxu0 0.0
    %911 = vmatpush2.msra.mxu0 0.0
    %912 = vmatprep.subr.mxu0 0.0
    %913 = vmatpush2.msra.mxu0 0.0
    %914 = vmatprep.subr.mxu0 0.0
    %915 = vmatpush2.msra.mxu0 0.0
    %916 = vmatprep.subr.mxu0 0.0
    %917 = vmatpush2.msra.mxu0 0.0
    %918 = vmatprep.subr.mxu0 0.0
    %919 = vmatpush2.msra.mxu0 0.0
    %920 = vmatprep.subr.mxu0 0.0
    %921 = vmatpush2.msra.mxu0 0.0
    %922 = vmatprep.subr.mxu0 0.0
    %923 = vmatpush2.msra.mxu0 0.0
    %924 = vmatprep.subr.mxu0 0.0
    %925 = vmatpush2.msra.mxu0 0.0
    %926 = vmatprep.subr.mxu0 0.0
    %927 = vmatpush2.msra.mxu0 0.0
    %928 = vmatprep.subr.mxu0 0.0
    %929 = vmatpush2.msra.mxu0 0.0
    %930 = vmatprep.subr.mxu0 0.0
    %931 = vmatpush2.msra.mxu0 0.0
    %932 = vmatprep.mubr.f32.mxu0 0.0
    %933 = vmatmul.mubr.f32.gmra.mxu0 %v679
    %v934 = vpop.f32.mrf.mxu0
    %v935 = vadd.f32 0.0, %v934
    %v936 = vpop.f32.mrf.mxu0
    %937 = vdwg.mxu0
    %v938 = vadd.f32 %v867, %v935
    %v939 = vmul.f32 %v938, %v61
    %v940 = vtanh.pop %v939
    %v941 = vmul.f32 %v940, %v61
    %v942 = vadd.f32 %v941, %v62
    %v943 = vmul.f32 %v942, %v669
    %945 = vrot.lane.b32.xlu0 %v942, 64
    %v946 = vpop.permute.xlu0 %945
    %v948 = vmul.f32 %v942, %v946
    %950 = vrot.lane.b32.xlu0 %v948, 32
    %v951 = vpop.permute.xlu0 %950
    %v953 = vadd.f32 %v943, %v951
    %v954 = vtanh.pop %v953
    %956 = vrot.lane.b32.xlu0 %v954, 64
    %v957 = vpop.permute.xlu0 %956
    %v959 = vmul.f32 %v942, %v957
    %961 = vrot.lane.b32.xlu0 %v959, 32
    %v962 = vpop.permute.xlu0 %961
    %v963 = vsel %vm110, %v962, 0
    %965 = vmatprep.subr.mxu0 0.0
    %966 = vmatpush1.msra.mxu0 0.0
    %967 = vmatprep.subr.mxu0 0.0
    %968 = vmatpush1.msra.mxu0 0.0
    %969 = vmatprep.subr.mxu0 0.0
    %970 = vmatpush1.msra.mxu0 0.0
    %971 = vmatprep.subr.mxu0 0.0
    %972 = vmatpush1.msra.mxu0 0.0
    %973 = vmatprep.subr.mxu0 0.0
    %974 = vmatpush1.msra.mxu0 0.0
    %975 = vmatprep.subr.mxu0 0.0
    %976 = vmatpush1.msra.mxu0 0.0
    %977 = vmatprep.subr.mxu0 0.0
    %978 = vmatpush1.msra.mxu0 0.0
    %979 = vmatprep.subr.mxu0 0.0
    %980 = vmatpush1.msra.mxu0 0.0
    %981 = vmatprep.subr.mxu0 0.0
    %982 = vmatpush1.msra.mxu0 0.0
    %983 = vmatprep.subr.mxu0 0.0
    %984 = vmatpush1.msra.mxu0 0.0
    %985 = vmatprep.subr.mxu0 0.0
    %986 = vmatpush1.msra.mxu0 0.0
    %987 = vmatprep.subr.mxu0 0.0
    %988 = vmatpush1.msra.mxu0 0.0
    %989 = vmatprep.subr.mxu0 0.0
    %990 = vmatpush1.msra.mxu0 %v46
    %991 = vmatprep.subr.mxu0 0.0
    %992 = vmatpush1.msra.mxu0 %v45
    %993 = vmatprep.subr.mxu0 0.0
    %994 = vmatpush1.msra.mxu0 %v44
    %995 = vmatprep.subr.mxu0 0.0
    %996 = vmatpush1.msra.mxu0 %v43
    %997 = vmatprep.subr.mxu0 0.0
    %998 = vmatpush2.msra.mxu0 0.0
    %999 = vmatprep.subr.mxu0 0.0
    %1000 = vmatpush2.msra.mxu0 0.0
    %1001 = vmatprep.subr.mxu0 0.0
    %1002 = vmatpush2.msra.mxu0 0.0
    %1003 = vmatprep.subr.mxu0 0.0
    %1004 = vmatpush2.msra.mxu0 0.0
    %1005 = vmatprep.subr.mxu0 0.0
    %1006 = vmatpush2.msra.mxu0 0.0
    %1007 = vmatprep.subr.mxu0 0.0
    %1008 = vmatpush2.msra.mxu0 0.0
    %1009 = vmatprep.subr.mxu0 0.0
    %1010 = vmatpush2.msra.mxu0 0.0
    %1011 = vmatprep.subr.mxu0 0.0
    %1012 = vmatpush2.msra.mxu0 0.0
    %1013 = vmatprep.subr.mxu0 0.0
    %1014 = vmatpush2.msra.mxu0 0.0
    %1015 = vmatprep.subr.mxu0 0.0
    %1016 = vmatpush2.msra.mxu0 0.0
    %1017 = vmatprep.subr.mxu0 0.0
    %1018 = vmatpush2.msra.mxu0 0.0
    %1019 = vmatprep.subr.mxu0 0.0
    %1020 = vmatpush2.msra.mxu0 0.0
    %1021 = vmatprep.subr.mxu0 0.0
    %1022 = vmatpush2.msra.mxu0 0.0
    %1023 = vmatprep.subr.mxu0 0.0
    %1024 = vmatpush2.msra.mxu0 0.0
    %1025 = vmatprep.subr.mxu0 0.0
    %1026 = vmatpush2.msra.mxu0 0.0
    %1027 = vmatprep.subr.mxu0 0.0
    %1028 = vmatpush2.msra.mxu0 0.0
    %1029 = vmatprep.mubr.f32.mxu0 0.0
    %1030 = vmatmul.mubr.f32.gmra.mxu0 %v963
    %v1031 = vpop.f32.mrf.mxu0
    %v1032 = vadd.f32 %v844, %v1031
    %v1033 = vpop.f32.mrf.mxu0
    %1034 = vdwg.mxu0
    %v1035 = vmul.f32 %v1032, %v61
    %v1036 = vtanh.pop %v1035
    %v1037 = vmul.f32 %v1036, %v61
    %v1038 = vadd.f32 %v1037, %v62
    %v1039 = vmul.f32 %v1038, %v765
    %1041 = vrot.lane.b32.xlu0 %v1038, 64
    %v1042 = vpop.permute.xlu0 %1041
    %v1044 = vmul.f32 %v1038, %v1042
    %1046 = vrot.lane.b32.xlu0 %v1044, 32
    %v1047 = vpop.permute.xlu0 %1046
    %v1049 = vadd.f32 %v1039, %v1047
    %v1050 = vtanh.pop %v1049
    %1052 = vrot.lane.b32.xlu0 %v1050, 64
    %v1053 = vpop.permute.xlu0 %1052
    %v1055 = vmul.f32 %v1038, %v1053
    %1057 = vrot.lane.b32.xlu0 %v1055, 32
    %v1058 = vpop.permute.xlu0 %1057
    %v1059 = vsel %vm110, %v1058, 0
    %1061 = vmatprep.subr.mxu0 0.0
    %1062 = vmatpush1.msra.mxu0 0.0
    %1063 = vmatprep.subr.mxu0 0.0
    %1064 = vmatpush1.msra.mxu0 0.0
    %1065 = vmatprep.subr.mxu0 0.0
    %1066 = vmatpush1.msra.mxu0 0.0
    %1067 = vmatprep.subr.mxu0 0.0
    %1068 = vmatpush1.msra.mxu0 0.0
    %1069 = vmatprep.subr.mxu0 0.0
    %1070 = vmatpush1.msra.mxu0 0.0
    %1071 = vmatprep.subr.mxu0 0.0
    %1072 = vmatpush1.msra.mxu0 0.0
    %1073 = vmatprep.subr.mxu0 0.0
    %1074 = vmatpush1.msra.mxu0 0.0
    %1075 = vmatprep.subr.mxu0 0.0
    %1076 = vmatpush1.msra.mxu0 0.0
    %1077 = vmatprep.subr.mxu0 0.0
    %1078 = vmatpush1.msra.mxu0 0.0
    %1079 = vmatprep.subr.mxu0 0.0
    %1080 = vmatpush1.msra.mxu0 0.0
    %1081 = vmatprep.subr.mxu0 0.0
    %1082 = vmatpush1.msra.mxu0 0.0
    %1083 = vmatprep.subr.mxu0 0.0
    %1084 = vmatpush1.msra.mxu0 0.0
    %1085 = vmatprep.subr.mxu0 0.0
    %1086 = vmatpush1.msra.mxu0 %v50
    %1087 = vmatprep.subr.mxu0 0.0
    %1088 = vmatpush1.msra.mxu0 %v49
    %1089 = vmatprep.subr.mxu0 0.0
    %1090 = vmatpush1.msra.mxu0 %v48
    %1091 = vmatprep.subr.mxu0 0.0
    %1092 = vmatpush1.msra.mxu0 %v47
    %1093 = vmatprep.subr.mxu0 0.0
    %1094 = vmatpush2.msra.mxu0 0.0
    %1095 = vmatprep.subr.mxu0 0.0
    %1096 = vmatpush2.msra.mxu0 0.0
    %1097 = vmatprep.subr.mxu0 0.0
    %1098 = vmatpush2.msra.mxu0 0.0
    %1099 = vmatprep.subr.mxu0 0.0
    %1100 = vmatpush2.msra.mxu0 0.0
    %1101 = vmatprep.subr.mxu0 0.0
    %1102 = vmatpush2.msra.mxu0 0.0
    %1103 = vmatprep.subr.mxu0 0.0
    %1104 = vmatpush2.msra.mxu0 0.0
    %1105 = vmatprep.subr.mxu0 0.0
    %1106 = vmatpush2.msra.mxu0 0.0
    %1107 = vmatprep.subr.mxu0 0.0
    %1108 = vmatpush2.msra.mxu0 0.0
    %1109 = vmatprep.subr.mxu0 0.0
    %1110 = vmatpush2.msra.mxu0 0.0
    %1111 = vmatprep.subr.mxu0 0.0
    %1112 = vmatpush2.msra.mxu0 0.0
    %1113 = vmatprep.subr.mxu0 0.0
    %1114 = vmatpush2.msra.mxu0 0.0
    %1115 = vmatprep.subr.mxu0 0.0
    %1116 = vmatpush2.msra.mxu0 0.0
    %1117 = vmatprep.subr.mxu0 0.0
    %1118 = vmatpush2.msra.mxu0 0.0
    %1119 = vmatprep.subr.mxu0 0.0
    %1120 = vmatpush2.msra.mxu0 0.0
    %1121 = vmatprep.subr.mxu0 0.0
    %1122 = vmatpush2.msra.mxu0 0.0
    %1123 = vmatprep.subr.mxu0 0.0
    %1124 = vmatpush2.msra.mxu0 0.0
    %1125 = vmatprep.mubr.f32.mxu0 0.0
    %1126 = vmatmul.mubr.f32.gmra.mxu0 %v1059
    %v1127 = vpop.f32.mrf.mxu0
    %v1128 = vadd.f32 %v55, %v1127
    %v1129 = vpop.f32.mrf.mxu0
    %1130 = vdwg.mxu0
    %s1131 = sld [smem:[#allocation2 + $0x4]]
    %s1132 = sld [smem:[#allocation2 + $0x84]]
    %s1133 = scalar_lea.vmem [#allocation6], %s1131
    %v1134 = vld [vmem:[%s1133] sm:$0x1]
    %s1135 = sadd.s32 %s1132, 32
    %s1136 = scalar_lea.vmem [#allocation6], %s1135
    %v1137 = vld [vmem:[%s1136] sm:$0x1]
    %v1138 = vadd.f32 %v1134, %v1137
    %s1139 = sld [smem:[#allocation2 + $0xc]]
    %s1140 = sld [smem:[#allocation2 + $0x8c]]
    %s1141 = scalar_lea.vmem [#allocation6], %s1139
    %v1142 = vld [vmem:[%s1141] sm:$0x1]
    %s1143 = sadd.s32 %s1140, 32
    %s1144 = scalar_lea.vmem [#allocation6], %s1143
    %v1145 = vld [vmem:[%s1144] sm:$0x1]
    %v1146 = vadd.f32 %v1142, %v1145
    %v1148 = vrot.slane %v1146, 7
    %v1150 = vsel %vm82, %v1138, %v1148
    %v1151 = vsel %vm84, %v1150, 0.0
    %1152 = vmatprep.subr.mxu0 0.0
    %1153 = vmatpush1.msra.mxu0 0.0
    %1154 = vmatprep.subr.mxu0 0.0
    %1155 = vmatpush1.msra.mxu0 0.0
    %1156 = vmatprep.subr.mxu0 0.0
    %1157 = vmatpush1.msra.mxu0 0.0
    %1158 = vmatprep.subr.mxu0 0.0
    %1159 = vmatpush1.msra.mxu0 0.0
    %1160 = vmatprep.subr.mxu0 0.0
    %1161 = vmatpush1.msra.mxu0 0.0
    %1162 = vmatprep.subr.mxu0 0.0
    %1163 = vmatpush1.msra.mxu0 0.0
    %1164 = vmatprep.subr.mxu0 0.0
    %1165 = vmatpush1.msra.mxu0 0.0
    %1166 = vmatprep.subr.mxu0 0.0
    %1167 = vmatpush1.msra.mxu0 0.0
    %1168 = vmatprep.subr.mxu0 0.0
    %1169 = vmatpush1.msra.mxu0 0.0
    %1170 = vmatprep.subr.mxu0 0.0
    %1171 = vmatpush1.msra.mxu0 0.0
    %1172 = vmatprep.subr.mxu0 0.0
    %1173 = vmatpush1.msra.mxu0 0.0
    %1174 = vmatprep.subr.mxu0 0.0
    %1175 = vmatpush1.msra.mxu0 0.0
    %1176 = vmatprep.subr.mxu0 0.0
    %1177 = vmatpush1.msra.mxu0 %v42
    %1178 = vmatprep.subr.mxu0 0.0
    %1179 = vmatpush1.msra.mxu0 %v41
    %1180 = vmatprep.subr.mxu0 0.0
    %1181 = vmatpush1.msra.mxu0 %v40
    %1182 = vmatprep.subr.mxu0 0.0
    %1183 = vmatpush1.msra.mxu0 %v39
    %1184 = vmatprep.subr.mxu0 0.0
    %1185 = vmatpush2.msra.mxu0 0.0
    %1186 = vmatprep.subr.mxu0 0.0
    %1187 = vmatpush2.msra.mxu0 0.0
    %1188 = vmatprep.subr.mxu0 0.0
    %1189 = vmatpush2.msra.mxu0 0.0
    %1190 = vmatprep.subr.mxu0 0.0
    %1191 = vmatpush2.msra.mxu0 0.0
    %1192 = vmatprep.subr.mxu0 0.0
    %1193 = vmatpush2.msra.mxu0 0.0
    %1194 = vmatprep.subr.mxu0 0.0
    %1195 = vmatpush2.msra.mxu0 0.0
    %1196 = vmatprep.subr.mxu0 0.0
    %1197 = vmatpush2.msra.mxu0 0.0
    %1198 = vmatprep.subr.mxu0 0.0
    %1199 = vmatpush2.msra.mxu0 0.0
    %1200 = vmatprep.subr.mxu0 0.0
    %1201 = vmatpush2.msra.mxu0 0.0
    %1202 = vmatprep.subr.mxu0 0.0
    %1203 = vmatpush2.msra.mxu0 0.0
    %1204 = vmatprep.subr.mxu0 0.0
    %1205 = vmatpush2.msra.mxu0 0.0
    %1206 = vmatprep.subr.mxu0 0.0
    %1207 = vmatpush2.msra.mxu0 0.0
    %1208 = vmatprep.subr.mxu0 0.0
    %1209 = vmatpush2.msra.mxu0 0.0
    %1210 = vmatprep.subr.mxu0 0.0
    %1211 = vmatpush2.msra.mxu0 0.0
    %1212 = vmatprep.subr.mxu0 0.0
    %1213 = vmatpush2.msra.mxu0 0.0
    %1214 = vmatprep.subr.mxu0 0.0
    %1215 = vmatpush2.msra.mxu0 0.0
    %1216 = vmatprep.mubr.f32.mxu0 0.0
    %1217 = vmatmul.mubr.f32.gmra.mxu0 %v963
    %v1218 = vpop.f32.mrf.mxu0
    %v1219 = vadd.f32 0.0, %v1218
    %v1220 = vpop.f32.mrf.mxu0
    %1221 = vdwg.mxu0
    %v1222 = vadd.f32 %v1151, %v1219
    %v1223 = vmul.f32 %v1222, %v61
    %v1224 = vtanh.pop %v1223
    %v1225 = vmul.f32 %v1224, %v61
    %v1226 = vadd.f32 %v1225, %v62
    %v1227 = vmul.f32 %v1226, %v953
    %1229 = vrot.lane.b32.xlu0 %v1226, 64
    %v1230 = vpop.permute.xlu0 %1229
    %v1232 = vmul.f32 %v1226, %v1230
    %1234 = vrot.lane.b32.xlu0 %v1232, 32
    %v1235 = vpop.permute.xlu0 %1234
    %v1237 = vadd.f32 %v1227, %v1235
    %v1238 = vtanh.pop %v1237
    %1240 = vrot.lane.b32.xlu0 %v1238, 64
    %v1241 = vpop.permute.xlu0 %1240
    %v1243 = vmul.f32 %v1226, %v1241
    %1245 = vrot.lane.b32.xlu0 %v1243, 32
    %v1246 = vpop.permute.xlu0 %1245
    %v1247 = vsel %vm110, %v1246, 0
    %1249 = vmatprep.subr.mxu0 0.0
    %1250 = vmatpush1.msra.mxu0 0.0
    %1251 = vmatprep.subr.mxu0 0.0
    %1252 = vmatpush1.msra.mxu0 0.0
    %1253 = vmatprep.subr.mxu0 0.0
    %1254 = vmatpush1.msra.mxu0 0.0
    %1255 = vmatprep.subr.mxu0 0.0
    %1256 = vmatpush1.msra.mxu0 0.0
    %1257 = vmatprep.subr.mxu0 0.0
    %1258 = vmatpush1.msra.mxu0 0.0
    %1259 = vmatprep.subr.mxu0 0.0
    %1260 = vmatpush1.msra.mxu0 0.0
    %1261 = vmatprep.subr.mxu0 0.0
    %1262 = vmatpush1.msra.mxu0 0.0
    %1263 = vmatprep.subr.mxu0 0.0
    %1264 = vmatpush1.msra.mxu0 0.0
    %1265 = vmatprep.subr.mxu0 0.0
    %1266 = vmatpush1.msra.mxu0 0.0
    %1267 = vmatprep.subr.mxu0 0.0
    %1268 = vmatpush1.msra.mxu0 0.0
    %1269 = vmatprep.subr.mxu0 0.0
    %1270 = vmatpush1.msra.mxu0 0.0
    %1271 = vmatprep.subr.mxu0 0.0
    %1272 = vmatpush1.msra.mxu0 0.0
    %1273 = vmatprep.subr.mxu0 0.0
    %1274 = vmatpush1.msra.mxu0 %v46
    %1275 = vmatprep.subr.mxu0 0.0
    %1276 = vmatpush1.msra.mxu0 %v45
    %1277 = vmatprep.subr.mxu0 0.0
    %1278 = vmatpush1.msra.mxu0 %v44
    %1279 = vmatprep.subr.mxu0 0.0
    %1280 = vmatpush1.msra.mxu0 %v43
    %1281 = vmatprep.subr.mxu0 0.0
    %1282 = vmatpush2.msra.mxu0 0.0
    %1283 = vmatprep.subr.mxu0 0.0
    %1284 = vmatpush2.msra.mxu0 0.0
    %1285 = vmatprep.subr.mxu0 0.0
    %1286 = vmatpush2.msra.mxu0 0.0
    %1287 = vmatprep.subr.mxu0 0.0
    %1288 = vmatpush2.msra.mxu0 0.0
    %1289 = vmatprep.subr.mxu0 0.0
    %1290 = vmatpush2.msra.mxu0 0.0
    %1291 = vmatprep.subr.mxu0 0.0
    %1292 = vmatpush2.msra.mxu0 0.0
    %1293 = vmatprep.subr.mxu0 0.0
    %1294 = vmatpush2.msra.mxu0 0.0
    %1295 = vmatprep.subr.mxu0 0.0
    %1296 = vmatpush2.msra.mxu0 0.0
    %1297 = vmatprep.subr.mxu0 0.0
    %1298 = vmatpush2.msra.mxu0 0.0
    %1299 = vmatprep.subr.mxu0 0.0
    %1300 = vmatpush2.msra.mxu0 0.0
    %1301 = vmatprep.subr.mxu0 0.0
    %1302 = vmatpush2.msra.mxu0 0.0
    %1303 = vmatprep.subr.mxu0 0.0
    %1304 = vmatpush2.msra.mxu0 0.0
    %1305 = vmatprep.subr.mxu0 0.0
    %1306 = vmatpush2.msra.mxu0 0.0
    %1307 = vmatprep.subr.mxu0 0.0
    %1308 = vmatpush2.msra.mxu0 0.0
    %1309 = vmatprep.subr.mxu0 0.0
    %1310 = vmatpush2.msra.mxu0 0.0
    %1311 = vmatprep.subr.mxu0 0.0
    %1312 = vmatpush2.msra.mxu0 0.0
    %1313 = vmatprep.mubr.f32.mxu0 0.0
    %1314 = vmatmul.mubr.f32.gmra.mxu0 %v1247
    %v1315 = vpop.f32.mrf.mxu0
    %v1316 = vadd.f32 %v1128, %v1315
    %v1317 = vpop.f32.mrf.mxu0
    %1318 = vdwg.mxu0
    %v1319 = vmul.f32 %v1316, %v61
    %v1320 = vtanh.pop %v1319
    %v1321 = vmul.f32 %v1320, %v61
    %v1322 = vadd.f32 %v1321, %v62
    %v1323 = vmul.f32 %v1322, %v1049
    %1325 = vrot.lane.b32.xlu0 %v1322, 64
    %v1326 = vpop.permute.xlu0 %1325
    %v1328 = vmul.f32 %v1322, %v1326
    %1330 = vrot.lane.b32.xlu0 %v1328, 32
    %v1331 = vpop.permute.xlu0 %1330
    %v1333 = vadd.f32 %v1323, %v1331
    %v1334 = vtanh.pop %v1333
    %1336 = vrot.lane.b32.xlu0 %v1334, 64
    %v1337 = vpop.permute.xlu0 %1336
    %v1339 = vmul.f32 %v1322, %v1337
    %1341 = vrot.lane.b32.xlu0 %v1339, 32
    %v1342 = vpop.permute.xlu0 %1341
    %v1343 = vsel %vm110, %v1342, 0
    %1345 = vmatprep.subr.mxu0 0.0
    %1346 = vmatpush1.msra.mxu0 0.0
    %1347 = vmatprep.subr.mxu0 0.0
    %1348 = vmatpush1.msra.mxu0 0.0
    %1349 = vmatprep.subr.mxu0 0.0
    %1350 = vmatpush1.msra.mxu0 0.0
    %1351 = vmatprep.subr.mxu0 0.0
    %1352 = vmatpush1.msra.mxu0 0.0
    %1353 = vmatprep.subr.mxu0 0.0
    %1354 = vmatpush1.msra.mxu0 0.0
    %1355 = vmatprep.subr.mxu0 0.0
    %1356 = vmatpush1.msra.mxu0 0.0
    %1357 = vmatprep.subr.mxu0 0.0
    %1358 = vmatpush1.msra.mxu0 0.0
    %1359 = vmatprep.subr.mxu0 0.0
    %1360 = vmatpush1.msra.mxu0 0.0
    %1361 = vmatprep.subr.mxu0 0.0
    %1362 = vmatpush1.msra.mxu0 0.0
    %1363 = vmatprep.subr.mxu0 0.0
    %1364 = vmatpush1.msra.mxu0 0.0
    %1365 = vmatprep.subr.mxu0 0.0
    %1366 = vmatpush1.msra.mxu0 0.0
    %1367 = vmatprep.subr.mxu0 0.0
    %1368 = vmatpush1.msra.mxu0 0.0
    %1369 = vmatprep.subr.mxu0 0.0
    %1370 = vmatpush1.msra.mxu0 %v50
    %1371 = vmatprep.subr.mxu0 0.0
    %1372 = vmatpush1.msra.mxu0 %v49
    %1373 = vmatprep.subr.mxu0 0.0
    %1374 = vmatpush1.msra.mxu0 %v48
    %1375 = vmatprep.subr.mxu0 0.0
    %1376 = vmatpush1.msra.mxu0 %v47
    %1377 = vmatprep.subr.mxu0 0.0
    %1378 = vmatpush2.msra.mxu0 0.0
    %1379 = vmatprep.subr.mxu0 0.0
    %1380 = vmatpush2.msra.mxu0 0.0
    %1381 = vmatprep.subr.mxu0 0.0
    %1382 = vmatpush2.msra.mxu0 0.0
    %1383 = vmatprep.subr.mxu0 0.0
    %1384 = vmatpush2.msra.mxu0 0.0
    %1385 = vmatprep.subr.mxu0 0.0
    %1386 = vmatpush2.msra.mxu0 0.0
    %1387 = vmatprep.subr.mxu0 0.0
    %1388 = vmatpush2.msra.mxu0 0.0
    %1389 = vmatprep.subr.mxu0 0.0
    %1390 = vmatpush2.msra.mxu0 0.0
    %1391 = vmatprep.subr.mxu0 0.0
    %1392 = vmatpush2.msra.mxu0 0.0
    %1393 = vmatprep.subr.mxu0 0.0
    %1394 = vmatpush2.msra.mxu0 0.0
    %1395 = vmatprep.subr.mxu0 0.0
    %1396 = vmatpush2.msra.mxu0 0.0
    %1397 = vmatprep.subr.mxu0 0.0
    %1398 = vmatpush2.msra.mxu0 0.0
    %1399 = vmatprep.subr.mxu0 0.0
    %1400 = vmatpush2.msra.mxu0 0.0
    %1401 = vmatprep.subr.mxu0 0.0
    %1402 = vmatpush2.msra.mxu0 0.0
    %1403 = vmatprep.subr.mxu0 0.0
    %1404 = vmatpush2.msra.mxu0 0.0
    %1405 = vmatprep.subr.mxu0 0.0
    %1406 = vmatpush2.msra.mxu0 0.0
    %1407 = vmatprep.subr.mxu0 0.0
    %1408 = vmatpush2.msra.mxu0 0.0
    %1409 = vmatprep.mubr.f32.mxu0 0.0
    %1410 = vmatmul.mubr.f32.gmra.mxu0 %v1343
    %v1411 = vpop.f32.mrf.mxu0
    %v1412 = vadd.f32 %v55, %v1411
    %v1413 = vpop.f32.mrf.mxu0
    %1414 = vdwg.mxu0
    %s1415 = sld [smem:[#allocation2 + $0x5]]
    %s1416 = sld [smem:[#allocation2 + $0x85]]
    %s1417 = scalar_lea.vmem [#allocation6], %s1415
    %v1418 = vld [vmem:[%s1417] sm:$0x1]
    %s1419 = sadd.s32 %s1416, 32
    %s1420 = scalar_lea.vmem [#allocation6], %s1419
    %v1421 = vld [vmem:[%s1420] sm:$0x1]
    %v1422 = vadd.f32 %v1418, %v1421
    %s1423 = sld [smem:[#allocation2 + $0xd]]
    %s1424 = sld [smem:[#allocation2 + $0x8d]]
    %s1425 = scalar_lea.vmem [#allocation6], %s1423
    %v1426 = vld [vmem:[%s1425] sm:$0x1]
    %s1427 = sadd.s32 %s1424, 32
    %s1428 = scalar_lea.vmem [#allocation6], %s1427
    %v1429 = vld [vmem:[%s1428] sm:$0x1]
    %v1430 = vadd.f32 %v1426, %v1429
    %v1432 = vrot.slane %v1430, 7
    %v1434 = vsel %vm82, %v1422, %v1432
    %v1435 = vsel %vm84, %v1434, 0.0
    %1436 = vmatprep.subr.mxu0 0.0
    %1437 = vmatpush1.msra.mxu0 0.0
    %1438 = vmatprep.subr.mxu0 0.0
    %1439 = vmatpush1.msra.mxu0 0.0
    %1440 = vmatprep.subr.mxu0 0.0
    %1441 = vmatpush1.msra.mxu0 0.0
    %1442 = vmatprep.subr.mxu0 0.0
    %1443 = vmatpush1.msra.mxu0 0.0
    %1444 = vmatprep.subr.mxu0 0.0
    %1445 = vmatpush1.msra.mxu0 0.0
    %1446 = vmatprep.subr.mxu0 0.0
    %1447 = vmatpush1.msra.mxu0 0.0
    %1448 = vmatprep.subr.mxu0 0.0
    %1449 = vmatpush1.msra.mxu0 0.0
    %1450 = vmatprep.subr.mxu0 0.0
    %1451 = vmatpush1.msra.mxu0 0.0
    %1452 = vmatprep.subr.mxu0 0.0
    %1453 = vmatpush1.msra.mxu0 0.0
    %1454 = vmatprep.subr.mxu0 0.0
    %1455 = vmatpush1.msra.mxu0 0.0
    %1456 = vmatprep.subr.mxu0 0.0
    %1457 = vmatpush1.msra.mxu0 0.0
    %1458 = vmatprep.subr.mxu0 0.0
    %1459 = vmatpush1.msra.mxu0 0.0
    %1460 = vmatprep.subr.mxu0 0.0
    %1461 = vmatpush1.msra.mxu0 %v42
    %1462 = vmatprep.subr.mxu0 0.0
    %1463 = vmatpush1.msra.mxu0 %v41
    %1464 = vmatprep.subr.mxu0 0.0
    %1465 = vmatpush1.msra.mxu0 %v40
    %1466 = vmatprep.subr.mxu0 0.0
    %1467 = vmatpush1.msra.mxu0 %v39
    %1468 = vmatprep.subr.mxu0 0.0
    %1469 = vmatpush2.msra.mxu0 0.0
    %1470 = vmatprep.subr.mxu0 0.0
    %1471 = vmatpush2.msra.mxu0 0.0
    %1472 = vmatprep.subr.mxu0 0.0
    %1473 = vmatpush2.msra.mxu0 0.0
    %1474 = vmatprep.subr.mxu0 0.0
    %1475 = vmatpush2.msra.mxu0 0.0
    %1476 = vmatprep.subr.mxu0 0.0
    %1477 = vmatpush2.msra.mxu0 0.0
    %1478 = vmatprep.subr.mxu0 0.0
    %1479 = vmatpush2.msra.mxu0 0.0
    %1480 = vmatprep.subr.mxu0 0.0
    %1481 = vmatpush2.msra.mxu0 0.0
    %1482 = vmatprep.subr.mxu0 0.0
    %1483 = vmatpush2.msra.mxu0 0.0
    %1484 = vmatprep.subr.mxu0 0.0
    %1485 = vmatpush2.msra.mxu0 0.0
    %1486 = vmatprep.subr.mxu0 0.0
    %1487 = vmatpush2.msra.mxu0 0.0
    %1488 = vmatprep.subr.mxu0 0.0
    %1489 = vmatpush2.msra.mxu0 0.0
    %1490 = vmatprep.subr.mxu0 0.0
    %1491 = vmatpush2.msra.mxu0 0.0
    %1492 = vmatprep.subr.mxu0 0.0
    %1493 = vmatpush2.msra.mxu0 0.0
    %1494 = vmatprep.subr.mxu0 0.0
    %1495 = vmatpush2.msra.mxu0 0.0
    %1496 = vmatprep.subr.mxu0 0.0
    %1497 = vmatpush2.msra.mxu0 0.0
    %1498 = vmatprep.subr.mxu0 0.0
    %1499 = vmatpush2.msra.mxu0 0.0
    %1500 = vmatprep.mubr.f32.mxu0 0.0
    %1501 = vmatmul.mubr.f32.gmra.mxu0 %v1247
    %v1502 = vpop.f32.mrf.mxu0
    %v1503 = vadd.f32 0.0, %v1502
    %v1504 = vpop.f32.mrf.mxu0
    %1505 = vdwg.mxu0
    %v1506 = vadd.f32 %v1435, %v1503
    %v1507 = vmul.f32 %v1506, %v61
    %v1508 = vtanh.pop %v1507
    %v1509 = vmul.f32 %v1508, %v61
    %v1510 = vadd.f32 %v1509, %v62
    %v1511 = vmul.f32 %v1510, %v1237
    %1513 = vrot.lane.b32.xlu0 %v1510, 64
    %v1514 = vpop.permute.xlu0 %1513
    %v1516 = vmul.f32 %v1510, %v1514
    %1518 = vrot.lane.b32.xlu0 %v1516, 32
    %v1519 = vpop.permute.xlu0 %1518
    %v1521 = vadd.f32 %v1511, %v1519
    %v1522 = vtanh.pop %v1521
    %1524 = vrot.lane.b32.xlu0 %v1522, 64
    %v1525 = vpop.permute.xlu0 %1524
    %v1527 = vmul.f32 %v1510, %v1525
    %1529 = vrot.lane.b32.xlu0 %v1527, 32
    %v1530 = vpop.permute.xlu0 %1529
    %v1531 = vsel %vm110, %v1530, 0
    %1533 = vmatprep.subr.mxu0 0.0
    %1534 = vmatpush1.msra.mxu0 0.0
    %1535 = vmatprep.subr.mxu0 0.0
    %1536 = vmatpush1.msra.mxu0 0.0
    %1537 = vmatprep.subr.mxu0 0.0
    %1538 = vmatpush1.msra.mxu0 0.0
    %1539 = vmatprep.subr.mxu0 0.0
    %1540 = vmatpush1.msra.mxu0 0.0
    %1541 = vmatprep.subr.mxu0 0.0
    %1542 = vmatpush1.msra.mxu0 0.0
    %1543 = vmatprep.subr.mxu0 0.0
    %1544 = vmatpush1.msra.mxu0 0.0
    %1545 = vmatprep.subr.mxu0 0.0
    %1546 = vmatpush1.msra.mxu0 0.0
    %1547 = vmatprep.subr.mxu0 0.0
    %1548 = vmatpush1.msra.mxu0 0.0
    %1549 = vmatprep.subr.mxu0 0.0
    %1550 = vmatpush1.msra.mxu0 0.0
    %1551 = vmatprep.subr.mxu0 0.0
    %1552 = vmatpush1.msra.mxu0 0.0
    %1553 = vmatprep.subr.mxu0 0.0
    %1554 = vmatpush1.msra.mxu0 0.0
    %1555 = vmatprep.subr.mxu0 0.0
    %1556 = vmatpush1.msra.mxu0 0.0
    %1557 = vmatprep.subr.mxu0 0.0
    %1558 = vmatpush1.msra.mxu0 %v46
    %1559 = vmatprep.subr.mxu0 0.0
    %1560 = vmatpush1.msra.mxu0 %v45
    %1561 = vmatprep.subr.mxu0 0.0
    %1562 = vmatpush1.msra.mxu0 %v44
    %1563 = vmatprep.subr.mxu0 0.0
    %1564 = vmatpush1.msra.mxu0 %v43
    %1565 = vmatprep.subr.mxu0 0.0
    %1566 = vmatpush2.msra.mxu0 0.0
    %1567 = vmatprep.subr.mxu0 0.0
    %1568 = vmatpush2.msra.mxu0 0.0
    %1569 = vmatprep.subr.mxu0 0.0
    %1570 = vmatpush2.msra.mxu0 0.0
    %1571 = vmatprep.subr.mxu0 0.0
    %1572 = vmatpush2.msra.mxu0 0.0
    %1573 = vmatprep.subr.mxu0 0.0
    %1574 = vmatpush2.msra.mxu0 0.0
    %1575 = vmatprep.subr.mxu0 0.0
    %1576 = vmatpush2.msra.mxu0 0.0
    %1577 = vmatprep.subr.mxu0 0.0
    %1578 = vmatpush2.msra.mxu0 0.0
    %1579 = vmatprep.subr.mxu0 0.0
    %1580 = vmatpush2.msra.mxu0 0.0
    %1581 = vmatprep.subr.mxu0 0.0
    %1582 = vmatpush2.msra.mxu0 0.0
    %1583 = vmatprep.subr.mxu0 0.0
    %1584 = vmatpush2.msra.mxu0 0.0
    %1585 = vmatprep.subr.mxu0 0.0
    %1586 = vmatpush2.msra.mxu0 0.0
    %1587 = vmatprep.subr.mxu0 0.0
    %1588 = vmatpush2.msra.mxu0 0.0
    %1589 = vmatprep.subr.mxu0 0.0
    %1590 = vmatpush2.msra.mxu0 0.0
    %1591 = vmatprep.subr.mxu0 0.0
    %1592 = vmatpush2.msra.mxu0 0.0
    %1593 = vmatprep.subr.mxu0 0.0
    %1594 = vmatpush2.msra.mxu0 0.0
    %1595 = vmatprep.subr.mxu0 0.0
    %1596 = vmatpush2.msra.mxu0 0.0
    %1597 = vmatprep.mubr.f32.mxu0 0.0
    %1598 = vmatmul.mubr.f32.gmra.mxu0 %v1531
    %v1599 = vpop.f32.mrf.mxu0
    %v1600 = vadd.f32 %v1412, %v1599
    %v1601 = vpop.f32.mrf.mxu0
    %1602 = vdwg.mxu0
    %v1603 = vmul.f32 %v1600, %v61
    %v1604 = vtanh.pop %v1603
    %v1605 = vmul.f32 %v1604, %v61
    %v1606 = vadd.f32 %v1605, %v62
    %v1607 = vmul.f32 %v1606, %v1333
    %1609 = vrot.lane.b32.xlu0 %v1606, 64
    %v1610 = vpop.permute.xlu0 %1609
    %v1612 = vmul.f32 %v1606, %v1610
    %1614 = vrot.lane.b32.xlu0 %v1612, 32
    %v1615 = vpop.permute.xlu0 %1614
    %v1617 = vadd.f32 %v1607, %v1615
    %v1618 = vtanh.pop %v1617
    %1620 = vrot.lane.b32.xlu0 %v1618, 64
    %v1621 = vpop.permute.xlu0 %1620
    %v1623 = vmul.f32 %v1606, %v1621
    %1625 = vrot.lane.b32.xlu0 %v1623, 32
    %v1626 = vpop.permute.xlu0 %1625
    %v1627 = vsel %vm110, %v1626, 0
    %1629 = vmatprep.subr.mxu0 0.0
    %1630 = vmatpush1.msra.mxu0 0.0
    %1631 = vmatprep.subr.mxu0 0.0
    %1632 = vmatpush1.msra.mxu0 0.0
    %1633 = vmatprep.subr.mxu0 0.0
    %1634 = vmatpush1.msra.mxu0 0.0
    %1635 = vmatprep.subr.mxu0 0.0
    %1636 = vmatpush1.msra.mxu0 0.0
    %1637 = vmatprep.subr.mxu0 0.0
    %1638 = vmatpush1.msra.mxu0 0.0
    %1639 = vmatprep.subr.mxu0 0.0
    %1640 = vmatpush1.msra.mxu0 0.0
    %1641 = vmatprep.subr.mxu0 0.0
    %1642 = vmatpush1.msra.mxu0 0.0
    %1643 = vmatprep.subr.mxu0 0.0
    %1644 = vmatpush1.msra.mxu0 0.0
    %1645 = vmatprep.subr.mxu0 0.0
    %1646 = vmatpush1.msra.mxu0 0.0
    %1647 = vmatprep.subr.mxu0 0.0
    %1648 = vmatpush1.msra.mxu0 0.0
    %1649 = vmatprep.subr.mxu0 0.0
    %1650 = vmatpush1.msra.mxu0 0.0
    %1651 = vmatprep.subr.mxu0 0.0
    %1652 = vmatpush1.msra.mxu0 0.0
    %1653 = vmatprep.subr.mxu0 0.0
    %1654 = vmatpush1.msra.mxu0 %v50
    %1655 = vmatprep.subr.mxu0 0.0
    %1656 = vmatpush1.msra.mxu0 %v49
    %1657 = vmatprep.subr.mxu0 0.0
    %1658 = vmatpush1.msra.mxu0 %v48
    %1659 = vmatprep.subr.mxu0 0.0
    %1660 = vmatpush1.msra.mxu0 %v47
    %1661 = vmatprep.subr.mxu0 0.0
    %1662 = vmatpush2.msra.mxu0 0.0
    %1663 = vmatprep.subr.mxu0 0.0
    %1664 = vmatpush2.msra.mxu0 0.0
    %1665 = vmatprep.subr.mxu0 0.0
    %1666 = vmatpush2.msra.mxu0 0.0
    %1667 = vmatprep.subr.mxu0 0.0
    %1668 = vmatpush2.msra.mxu0 0.0
    %1669 = vmatprep.subr.mxu0 0.0
    %1670 = vmatpush2.msra.mxu0 0.0
    %1671 = vmatprep.subr.mxu0 0.0
    %1672 = vmatpush2.msra.mxu0 0.0
    %1673 = vmatprep.subr.mxu0 0.0
    %1674 = vmatpush2.msra.mxu0 0.0
    %1675 = vmatprep.subr.mxu0 0.0
    %1676 = vmatpush2.msra.mxu0 0.0
    %1677 = vmatprep.subr.mxu0 0.0
    %1678 = vmatpush2.msra.mxu0 0.0
    %1679 = vmatprep.subr.mxu0 0.0
    %1680 = vmatpush2.msra.mxu0 0.0
    %1681 = vmatprep.subr.mxu0 0.0
    %1682 = vmatpush2.msra.mxu0 0.0
    %1683 = vmatprep.subr.mxu0 0.0
    %1684 = vmatpush2.msra.mxu0 0.0
    %1685 = vmatprep.subr.mxu0 0.0
    %1686 = vmatpush2.msra.mxu0 0.0
    %1687 = vmatprep.subr.mxu0 0.0
    %1688 = vmatpush2.msra.mxu0 0.0
    %1689 = vmatprep.subr.mxu0 0.0
    %1690 = vmatpush2.msra.mxu0 0.0
    %1691 = vmatprep.subr.mxu0 0.0
    %1692 = vmatpush2.msra.mxu0 0.0
    %1693 = vmatprep.mubr.f32.mxu0 0.0
    %1694 = vmatmul.mubr.f32.gmra.mxu0 %v1627
    %v1695 = vpop.f32.mrf.mxu0
    %v1696 = vadd.f32 %v55, %v1695
    %v1697 = vpop.f32.mrf.mxu0
    %1698 = vdwg.mxu0
    %s1699 = sld [smem:[#allocation2 + $0x6]]
    %s1700 = sld [smem:[#allocation2 + $0x86]]
    %s1701 = scalar_lea.vmem [#allocation6], %s1699
    %v1702 = vld [vmem:[%s1701] sm:$0x1]
    %s1703 = sadd.s32 %s1700, 32
    %s1704 = scalar_lea.vmem [#allocation6], %s1703
    %v1705 = vld [vmem:[%s1704] sm:$0x1]
    %v1706 = vadd.f32 %v1702, %v1705
    %s1707 = sld [smem:[#allocation2 + $0xe]]
    %s1708 = sld [smem:[#allocation2 + $0x8e]]
    %s1709 = scalar_lea.vmem [#allocation6], %s1707
    %v1710 = vld [vmem:[%s1709] sm:$0x1]
    %s1711 = sadd.s32 %s1708, 32
    %s1712 = scalar_lea.vmem [#allocation6], %s1711
    %v1713 = vld [vmem:[%s1712] sm:$0x1]
    %v1714 = vadd.f32 %v1710, %v1713
    %v1716 = vrot.slane %v1714, 7
    %v1718 = vsel %vm82, %v1706, %v1716
    %v1719 = vsel %vm84, %v1718, 0.0
    %1720 = vmatprep.subr.mxu0 0.0
    %1721 = vmatpush1.msra.mxu0 0.0
    %1722 = vmatprep.subr.mxu0 0.0
    %1723 = vmatpush1.msra.mxu0 0.0
    %1724 = vmatprep.subr.mxu0 0.0
    %1725 = vmatpush1.msra.mxu0 0.0
    %1726 = vmatprep.subr.mxu0 0.0
    %1727 = vmatpush1.msra.mxu0 0.0
    %1728 = vmatprep.subr.mxu0 0.0
    %1729 = vmatpush1.msra.mxu0 0.0
    %1730 = vmatprep.subr.mxu0 0.0
    %1731 = vmatpush1.msra.mxu0 0.0
    %1732 = vmatprep.subr.mxu0 0.0
    %1733 = vmatpush1.msra.mxu0 0.0
    %1734 = vmatprep.subr.mxu0 0.0
    %1735 = vmatpush1.msra.mxu0 0.0
    %1736 = vmatprep.subr.mxu0 0.0
    %1737 = vmatpush1.msra.mxu0 0.0
    %1738 = vmatprep.subr.mxu0 0.0
    %1739 = vmatpush1.msra.mxu0 0.0
    %1740 = vmatprep.subr.mxu0 0.0
    %1741 = vmatpush1.msra.mxu0 0.0
    %1742 = vmatprep.subr.mxu0 0.0
    %1743 = vmatpush1.msra.mxu0 0.0
    %1744 = vmatprep.subr.mxu0 0.0
    %1745 = vmatpush1.msra.mxu0 %v42
    %1746 = vmatprep.subr.mxu0 0.0
    %1747 = vmatpush1.msra.mxu0 %v41
    %1748 = vmatprep.subr.mxu0 0.0
    %1749 = vmatpush1.msra.mxu0 %v40
    %1750 = vmatprep.subr.mxu0 0.0
    %1751 = vmatpush1.msra.mxu0 %v39
    %1752 = vmatprep.subr.mxu0 0.0
    %1753 = vmatpush2.msra.mxu0 0.0
    %1754 = vmatprep.subr.mxu0 0.0
    %1755 = vmatpush2.msra.mxu0 0.0
    %1756 = vmatprep.subr.mxu0 0.0
    %1757 = vmatpush2.msra.mxu0 0.0
    %1758 = vmatprep.subr.mxu0 0.0
    %1759 = vmatpush2.msra.mxu0 0.0
    %1760 = vmatprep.subr.mxu0 0.0
    %1761 = vmatpush2.msra.mxu0 0.0
    %1762 = vmatprep.subr.mxu0 0.0
    %1763 = vmatpush2.msra.mxu0 0.0
    %1764 = vmatprep.subr.mxu0 0.0
    %1765 = vmatpush2.msra.mxu0 0.0
    %1766 = vmatprep.subr.mxu0 0.0
    %1767 = vmatpush2.msra.mxu0 0.0
    %1768 = vmatprep.subr.mxu0 0.0
    %1769 = vmatpush2.msra.mxu0 0.0
    %1770 = vmatprep.subr.mxu0 0.0
    %1771 = vmatpush2.msra.mxu0 0.0
    %1772 = vmatprep.subr.mxu0 0.0
    %1773 = vmatpush2.msra.mxu0 0.0
    %1774 = vmatprep.subr.mxu0 0.0
    %1775 = vmatpush2.msra.mxu0 0.0
    %1776 = vmatprep.subr.mxu0 0.0
    %1777 = vmatpush2.msra.mxu0 0.0
    %1778 = vmatprep.subr.mxu0 0.0
    %1779 = vmatpush2.msra.mxu0 0.0
    %1780 = vmatprep.subr.mxu0 0.0
    %1781 = vmatpush2.msra.mxu0 0.0
    %1782 = vmatprep.subr.mxu0 0.0
    %1783 = vmatpush2.msra.mxu0 0.0
    %1784 = vmatprep.mubr.f32.mxu0 0.0
    %1785 = vmatmul.mubr.f32.gmra.mxu0 %v1531
    %v1786 = vpop.f32.mrf.mxu0
    %v1787 = vadd.f32 0.0, %v1786
    %v1788 = vpop.f32.mrf.mxu0
    %1789 = vdwg.mxu0
    %v1790 = vadd.f32 %v1719, %v1787
    %v1791 = vmul.f32 %v1790, %v61
    %v1792 = vtanh.pop %v1791
    %v1793 = vmul.f32 %v1792, %v61
    %v1794 = vadd.f32 %v1793, %v62
    %v1795 = vmul.f32 %v1794, %v1521
    %1797 = vrot.lane.b32.xlu0 %v1794, 64
    %v1798 = vpop.permute.xlu0 %1797
    %v1800 = vmul.f32 %v1794, %v1798
    %1802 = vrot.lane.b32.xlu0 %v1800, 32
    %v1803 = vpop.permute.xlu0 %1802
    %v1805 = vadd.f32 %v1795, %v1803
    %v1806 = vtanh.pop %v1805
    %1808 = vrot.lane.b32.xlu0 %v1806, 64
    %v1809 = vpop.permute.xlu0 %1808
    %v1811 = vmul.f32 %v1794, %v1809
    %1813 = vrot.lane.b32.xlu0 %v1811, 32
    %v1814 = vpop.permute.xlu0 %1813
    %v1815 = vsel %vm110, %v1814, 0
    %1817 = vmatprep.subr.mxu0 0.0
    %1818 = vmatpush1.msra.mxu0 0.0
    %1819 = vmatprep.subr.mxu0 0.0
    %1820 = vmatpush1.msra.mxu0 0.0
    %1821 = vmatprep.subr.mxu0 0.0
    %1822 = vmatpush1.msra.mxu0 0.0
    %1823 = vmatprep.subr.mxu0 0.0
    %1824 = vmatpush1.msra.mxu0 0.0
    %1825 = vmatprep.subr.mxu0 0.0
    %1826 = vmatpush1.msra.mxu0 0.0
    %1827 = vmatprep.subr.mxu0 0.0
    %1828 = vmatpush1.msra.mxu0 0.0
    %1829 = vmatprep.subr.mxu0 0.0
    %1830 = vmatpush1.msra.mxu0 0.0
    %1831 = vmatprep.subr.mxu0 0.0
    %1832 = vmatpush1.msra.mxu0 0.0
    %1833 = vmatprep.subr.mxu0 0.0
    %1834 = vmatpush1.msra.mxu0 0.0
    %1835 = vmatprep.subr.mxu0 0.0
    %1836 = vmatpush1.msra.mxu0 0.0
    %1837 = vmatprep.subr.mxu0 0.0
    %1838 = vmatpush1.msra.mxu0 0.0
    %1839 = vmatprep.subr.mxu0 0.0
    %1840 = vmatpush1.msra.mxu0 0.0
    %1841 = vmatprep.subr.mxu0 0.0
    %1842 = vmatpush1.msra.mxu0 %v46
    %1843 = vmatprep.subr.mxu0 0.0
    %1844 = vmatpush1.msra.mxu0 %v45
    %1845 = vmatprep.subr.mxu0 0.0
    %1846 = vmatpush1.msra.mxu0 %v44
    %1847 = vmatprep.subr.mxu0 0.0
    %1848 = vmatpush1.msra.mxu0 %v43
    %1849 = vmatprep.subr.mxu0 0.0
    %1850 = vmatpush2.msra.mxu0 0.0
    %1851 = vmatprep.subr.mxu0 0.0
    %1852 = vmatpush2.msra.mxu0 0.0
    %1853 = vmatprep.subr.mxu0 0.0
    %1854 = vmatpush2.msra.mxu0 0.0
    %1855 = vmatprep.subr.mxu0 0.0
    %1856 = vmatpush2.msra.mxu0 0.0
    %1857 = vmatprep.subr.mxu0 0.0
    %1858 = vmatpush2.msra.mxu0 0.0
    %1859 = vmatprep.subr.mxu0 0.0
    %1860 = vmatpush2.msra.mxu0 0.0
    %1861 = vmatprep.subr.mxu0 0.0
    %1862 = vmatpush2.msra.mxu0 0.0
    %1863 = vmatprep.subr.mxu0 0.0
    %1864 = vmatpush2.msra.mxu0 0.0
    %1865 = vmatprep.subr.mxu0 0.0
    %1866 = vmatpush2.msra.mxu0 0.0
    %1867 = vmatprep.subr.mxu0 0.0
    %1868 = vmatpush2.msra.mxu0 0.0
    %1869 = vmatprep.subr.mxu0 0.0
    %1870 = vmatpush2.msra.mxu0 0.0
    %1871 = vmatprep.subr.mxu0 0.0
    %1872 = vmatpush2.msra.mxu0 0.0
    %1873 = vmatprep.subr.mxu0 0.0
    %1874 = vmatpush2.msra.mxu0 0.0
    %1875 = vmatprep.subr.mxu0 0.0
    %1876 = vmatpush2.msra.mxu0 0.0
    %1877 = vmatprep.subr.mxu0 0.0
    %1878 = vmatpush2.msra.mxu0 0.0
    %1879 = vmatprep.subr.mxu0 0.0
    %1880 = vmatpush2.msra.mxu0 0.0
    %1881 = vmatprep.mubr.f32.mxu0 0.0
    %1882 = vmatmul.mubr.f32.gmra.mxu0 %v1815
    %v1883 = vpop.f32.mrf.mxu0
    %v1884 = vadd.f32 %v1696, %v1883
    %v1885 = vpop.f32.mrf.mxu0
    %1886 = vdwg.mxu0
    %v1887 = vmul.f32 %v1884, %v61
    %v1888 = vtanh.pop %v1887
    %v1889 = vmul.f32 %v1888, %v61
    %v1890 = vadd.f32 %v1889, %v62
    %v1891 = vmul.f32 %v1890, %v1617
    %1893 = vrot.lane.b32.xlu0 %v1890, 64
    %v1894 = vpop.permute.xlu0 %1893
    %v1896 = vmul.f32 %v1890, %v1894
    %1898 = vrot.lane.b32.xlu0 %v1896, 32
    %v1899 = vpop.permute.xlu0 %1898
    %v1901 = vadd.f32 %v1891, %v1899
    %v1902 = vtanh.pop %v1901
    %1904 = vrot.lane.b32.xlu0 %v1902, 64
    %v1905 = vpop.permute.xlu0 %1904
    %v1907 = vmul.f32 %v1890, %v1905
    %1909 = vrot.lane.b32.xlu0 %v1907, 32
    %v1910 = vpop.permute.xlu0 %1909
    %v1911 = vsel %vm110, %v1910, 0
    %1913 = vmatprep.subr.mxu0 0.0
    %1914 = vmatpush1.msra.mxu0 0.0
    %1915 = vmatprep.subr.mxu0 0.0
    %1916 = vmatpush1.msra.mxu0 0.0
    %1917 = vmatprep.subr.mxu0 0.0
    %1918 = vmatpush1.msra.mxu0 0.0
    %1919 = vmatprep.subr.mxu0 0.0
    %1920 = vmatpush1.msra.mxu0 0.0
    %1921 = vmatprep.subr.mxu0 0.0
    %1922 = vmatpush1.msra.mxu0 0.0
    %1923 = vmatprep.subr.mxu0 0.0
    %1924 = vmatpush1.msra.mxu0 0.0
    %1925 = vmatprep.subr.mxu0 0.0
    %1926 = vmatpush1.msra.mxu0 0.0
    %1927 = vmatprep.subr.mxu0 0.0
    %1928 = vmatpush1.msra.mxu0 0.0
    %1929 = vmatprep.subr.mxu0 0.0
    %1930 = vmatpush1.msra.mxu0 0.0
    %1931 = vmatprep.subr.mxu0 0.0
    %1932 = vmatpush1.msra.mxu0 0.0
    %1933 = vmatprep.subr.mxu0 0.0
    %1934 = vmatpush1.msra.mxu0 0.0
    %1935 = vmatprep.subr.mxu0 0.0
    %1936 = vmatpush1.msra.mxu0 0.0
    %1937 = vmatprep.subr.mxu0 0.0
    %1938 = vmatpush1.msra.mxu0 %v50
    %1939 = vmatprep.subr.mxu0 0.0
    %1940 = vmatpush1.msra.mxu0 %v49
    %1941 = vmatprep.subr.mxu0 0.0
    %1942 = vmatpush1.msra.mxu0 %v48
    %1943 = vmatprep.subr.mxu0 0.0
    %1944 = vmatpush1.msra.mxu0 %v47
    %1945 = vmatprep.subr.mxu0 0.0
    %1946 = vmatpush2.msra.mxu0 0.0
    %1947 = vmatprep.subr.mxu0 0.0
    %1948 = vmatpush2.msra.mxu0 0.0
    %1949 = vmatprep.subr.mxu0 0.0
    %1950 = vmatpush2.msra.mxu0 0.0
    %1951 = vmatprep.subr.mxu0 0.0
    %1952 = vmatpush2.msra.mxu0 0.0
    %1953 = vmatprep.subr.mxu0 0.0
    %1954 = vmatpush2.msra.mxu0 0.0
    %1955 = vmatprep.subr.mxu0 0.0
    %1956 = vmatpush2.msra.mxu0 0.0
    %1957 = vmatprep.subr.mxu0 0.0
    %1958 = vmatpush2.msra.mxu0 0.0
    %1959 = vmatprep.subr.mxu0 0.0
    %1960 = vmatpush2.msra.mxu0 0.0
    %1961 = vmatprep.subr.mxu0 0.0
    %1962 = vmatpush2.msra.mxu0 0.0
    %1963 = vmatprep.subr.mxu0 0.0
    %1964 = vmatpush2.msra.mxu0 0.0
    %1965 = vmatprep.subr.mxu0 0.0
    %1966 = vmatpush2.msra.mxu0 0.0
    %1967 = vmatprep.subr.mxu0 0.0
    %1968 = vmatpush2.msra.mxu0 0.0
    %1969 = vmatprep.subr.mxu0 0.0
    %1970 = vmatpush2.msra.mxu0 0.0
    %1971 = vmatprep.subr.mxu0 0.0
    %1972 = vmatpush2.msra.mxu0 0.0
    %1973 = vmatprep.subr.mxu0 0.0
    %1974 = vmatpush2.msra.mxu0 0.0
    %1975 = vmatprep.subr.mxu0 0.0
    %1976 = vmatpush2.msra.mxu0 0.0
    %1977 = vmatprep.mubr.f32.mxu0 0.0
    %1978 = vmatmul.mubr.f32.gmra.mxu0 %v1911
    %v1979 = vpop.f32.mrf.mxu0
    %v1980 = vadd.f32 %v55, %v1979
    %v1981 = vpop.f32.mrf.mxu0
    %1982 = vdwg.mxu0
    %s1983 = sld [smem:[#allocation2 + $0x7]]
    %s1984 = sld [smem:[#allocation2 + $0x87]]
    %s1985 = scalar_lea.vmem [#allocation6], %s1983
    %v1986 = vld [vmem:[%s1985] sm:$0x1]
    %s1987 = sadd.s32 %s1984, 32
    %s1988 = scalar_lea.vmem [#allocation6], %s1987
    %v1989 = vld [vmem:[%s1988] sm:$0x1]
    %v1990 = vadd.f32 %v1986, %v1989
    %s1991 = sld [smem:[#allocation2 + $0xf]]
    %s1992 = sld [smem:[#allocation2 + $0x8f]]
    %s1993 = scalar_lea.vmem [#allocation6], %s1991
    %v1994 = vld [vmem:[%s1993] sm:$0x1]
    %s1995 = sadd.s32 %s1992, 32
    %s1996 = scalar_lea.vmem [#allocation6], %s1995
    %v1997 = vld [vmem:[%s1996] sm:$0x1]
    %v1998 = vadd.f32 %v1994, %v1997
    %v2000 = vrot.slane %v1998, 7
    %v2002 = vsel %vm82, %v1990, %v2000
    %v2003 = vsel %vm84, %v2002, 0.0
    %2004 = vmatprep.subr.mxu0 0.0
    %2005 = vmatpush1.msra.mxu0 0.0
    %2006 = vmatprep.subr.mxu0 0.0
    %2007 = vmatpush1.msra.mxu0 0.0
    %2008 = vmatprep.subr.mxu0 0.0
    %2009 = vmatpush1.msra.mxu0 0.0
    %2010 = vmatprep.subr.mxu0 0.0
    %2011 = vmatpush1.msra.mxu0 0.0
    %2012 = vmatprep.subr.mxu0 0.0
    %2013 = vmatpush1.msra.mxu0 0.0
    %2014 = vmatprep.subr.mxu0 0.0
    %2015 = vmatpush1.msra.mxu0 0.0
    %2016 = vmatprep.subr.mxu0 0.0
    %2017 = vmatpush1.msra.mxu0 0.0
    %2018 = vmatprep.subr.mxu0 0.0
    %2019 = vmatpush1.msra.mxu0 0.0
    %2020 = vmatprep.subr.mxu0 0.0
    %2021 = vmatpush1.msra.mxu0 0.0
    %2022 = vmatprep.subr.mxu0 0.0
    %2023 = vmatpush1.msra.mxu0 0.0
    %2024 = vmatprep.subr.mxu0 0.0
    %2025 = vmatpush1.msra.mxu0 0.0
    %2026 = vmatprep.subr.mxu0 0.0
    %2027 = vmatpush1.msra.mxu0 0.0
    %2028 = vmatprep.subr.mxu0 0.0
    %2029 = vmatpush1.msra.mxu0 %v42
    %2030 = vmatprep.subr.mxu0 0.0
    %2031 = vmatpush1.msra.mxu0 %v41
    %2032 = vmatprep.subr.mxu0 0.0
    %2033 = vmatpush1.msra.mxu0 %v40
    %2034 = vmatprep.subr.mxu0 0.0
    %2035 = vmatpush1.msra.mxu0 %v39
    %2036 = vmatprep.subr.mxu0 0.0
    %2037 = vmatpush2.msra.mxu0 0.0
    %2038 = vmatprep.subr.mxu0 0.0
    %2039 = vmatpush2.msra.mxu0 0.0
    %2040 = vmatprep.subr.mxu0 0.0
    %2041 = vmatpush2.msra.mxu0 0.0
    %2042 = vmatprep.subr.mxu0 0.0
    %2043 = vmatpush2.msra.mxu0 0.0
    %2044 = vmatprep.subr.mxu0 0.0
    %2045 = vmatpush2.msra.mxu0 0.0
    %2046 = vmatprep.subr.mxu0 0.0
    %2047 = vmatpush2.msra.mxu0 0.0
    %2048 = vmatprep.subr.mxu0 0.0
    %2049 = vmatpush2.msra.mxu0 0.0
    %2050 = vmatprep.subr.mxu0 0.0
    %2051 = vmatpush2.msra.mxu0 0.0
    %2052 = vmatprep.subr.mxu0 0.0
    %2053 = vmatpush2.msra.mxu0 0.0
    %2054 = vmatprep.subr.mxu0 0.0
    %2055 = vmatpush2.msra.mxu0 0.0
    %2056 = vmatprep.subr.mxu0 0.0
    %2057 = vmatpush2.msra.mxu0 0.0
    %2058 = vmatprep.subr.mxu0 0.0
    %2059 = vmatpush2.msra.mxu0 0.0
    %2060 = vmatprep.subr.mxu0 0.0
    %2061 = vmatpush2.msra.mxu0 0.0
    %2062 = vmatprep.subr.mxu0 0.0
    %2063 = vmatpush2.msra.mxu0 0.0
    %2064 = vmatprep.subr.mxu0 0.0
    %2065 = vmatpush2.msra.mxu0 0.0
    %2066 = vmatprep.subr.mxu0 0.0
    %2067 = vmatpush2.msra.mxu0 0.0
    %2068 = vmatprep.mubr.f32.mxu0 0.0
    %2069 = vmatmul.mubr.f32.gmra.mxu0 %v1815
    %v2070 = vpop.f32.mrf.mxu0
    %v2071 = vadd.f32 0.0, %v2070
    %v2072 = vpop.f32.mrf.mxu0
    %2073 = vdwg.mxu0
    %v2074 = vadd.f32 %v2003, %v2071
    %v2075 = vmul.f32 %v2074, %v61
    %v2076 = vtanh.pop %v2075
    %v2077 = vmul.f32 %v2076, %v61
    %v2078 = vadd.f32 %v2077, %v62
    %v2079 = vmul.f32 %v2078, %v1805
    %2081 = vrot.lane.b32.xlu0 %v2078, 64
    %v2082 = vpop.permute.xlu0 %2081
    %v2084 = vmul.f32 %v2078, %v2082
    %2086 = vrot.lane.b32.xlu0 %v2084, 32
    %v2087 = vpop.permute.xlu0 %2086
    %v2089 = vadd.f32 %v2079, %v2087
    %v2090 = vtanh.pop %v2089
    %2092 = vrot.lane.b32.xlu0 %v2090, 64
    %v2093 = vpop.permute.xlu0 %2092
    %v2095 = vmul.f32 %v2078, %v2093
    %2097 = vrot.lane.b32.xlu0 %v2095, 32
    %v2098 = vpop.permute.xlu0 %2097
    %v2099 = vsel %vm110, %v2098, 0
    %2101 = vmatprep.subr.mxu0 0.0
    %2102 = vmatpush1.msra.mxu0 0.0
    %2103 = vmatprep.subr.mxu0 0.0
    %2104 = vmatpush1.msra.mxu0 0.0
    %2105 = vmatprep.subr.mxu0 0.0
    %2106 = vmatpush1.msra.mxu0 0.0
    %2107 = vmatprep.subr.mxu0 0.0
    %2108 = vmatpush1.msra.mxu0 0.0
    %2109 = vmatprep.subr.mxu0 0.0
    %2110 = vmatpush1.msra.mxu0 0.0
    %2111 = vmatprep.subr.mxu0 0.0
    %2112 = vmatpush1.msra.mxu0 0.0
    %2113 = vmatprep.subr.mxu0 0.0
    %2114 = vmatpush1.msra.mxu0 0.0
    %2115 = vmatprep.subr.mxu0 0.0
    %2116 = vmatpush1.msra.mxu0 0.0
    %2117 = vmatprep.subr.mxu0 0.0
    %2118 = vmatpush1.msra.mxu0 0.0
    %2119 = vmatprep.subr.mxu0 0.0
    %2120 = vmatpush1.msra.mxu0 0.0
    %2121 = vmatprep.subr.mxu0 0.0
    %2122 = vmatpush1.msra.mxu0 0.0
    %2123 = vmatprep.subr.mxu0 0.0
    %2124 = vmatpush1.msra.mxu0 0.0
    %2125 = vmatprep.subr.mxu0 0.0
    %2126 = vmatpush1.msra.mxu0 %v46
    %2127 = vmatprep.subr.mxu0 0.0
    %2128 = vmatpush1.msra.mxu0 %v45
    %2129 = vmatprep.subr.mxu0 0.0
    %2130 = vmatpush1.msra.mxu0 %v44
    %2131 = vmatprep.subr.mxu0 0.0
    %2132 = vmatpush1.msra.mxu0 %v43
    %2133 = vmatprep.subr.mxu0 0.0
    %2134 = vmatpush2.msra.mxu0 0.0
    %2135 = vmatprep.subr.mxu0 0.0
    %2136 = vmatpush2.msra.mxu0 0.0
    %2137 = vmatprep.subr.mxu0 0.0
    %2138 = vmatpush2.msra.mxu0 0.0
    %2139 = vmatprep.subr.mxu0 0.0
    %2140 = vmatpush2.msra.mxu0 0.0
    %2141 = vmatprep.subr.mxu0 0.0
    %2142 = vmatpush2.msra.mxu0 0.0
    %2143 = vmatprep.subr.mxu0 0.0
    %2144 = vmatpush2.msra.mxu0 0.0
    %2145 = vmatprep.subr.mxu0 0.0
    %2146 = vmatpush2.msra.mxu0 0.0
    %2147 = vmatprep.subr.mxu0 0.0
    %2148 = vmatpush2.msra.mxu0 0.0
    %2149 = vmatprep.subr.mxu0 0.0
    %2150 = vmatpush2.msra.mxu0 0.0
    %2151 = vmatprep.subr.mxu0 0.0
    %2152 = vmatpush2.msra.mxu0 0.0
    %2153 = vmatprep.subr.mxu0 0.0
    %2154 = vmatpush2.msra.mxu0 0.0
    %2155 = vmatprep.subr.mxu0 0.0
    %2156 = vmatpush2.msra.mxu0 0.0
    %2157 = vmatprep.subr.mxu0 0.0
    %2158 = vmatpush2.msra.mxu0 0.0
    %2159 = vmatprep.subr.mxu0 0.0
    %2160 = vmatpush2.msra.mxu0 0.0
    %2161 = vmatprep.subr.mxu0 0.0
    %2162 = vmatpush2.msra.mxu0 0.0
    %2163 = vmatprep.subr.mxu0 0.0
    %2164 = vmatpush2.msra.mxu0 0.0
    %2165 = vmatprep.mubr.f32.mxu0 0.0
    %2166 = vmatmul.mubr.f32.gmra.mxu0 %v2099
    %v2167 = vpop.f32.mrf.mxu0
    %v2168 = vadd.f32 %v1980, %v2167
    %v2169 = vpop.f32.mrf.mxu0
    %2170 = vdwg.mxu0
    %v2171 = vmul.f32 %v2168, %v61
    %v2172 = vtanh.pop %v2171
    %v2173 = vmul.f32 %v2172, %v61
    %v2174 = vadd.f32 %v2173, %v62
    %v2175 = vmul.f32 %v2174, %v1901
    %2177 = vrot.lane.b32.xlu0 %v2174, 64
    %v2178 = vpop.permute.xlu0 %2177
    %v2180 = vmul.f32 %v2174, %v2178
    %2182 = vrot.lane.b32.xlu0 %v2180, 32
    %v2183 = vpop.permute.xlu0 %2182
    %v2185 = vadd.f32 %v2175, %v2183
    %v2186 = vtanh.pop %v2185
    %2188 = vrot.lane.b32.xlu0 %v2186, 64
    %v2189 = vpop.permute.xlu0 %2188
    %v2191 = vmul.f32 %v2174, %v2189
    %v2192 = vld [vmem:[#allocation6 + $0xb8] sm:$0xff]
    %v2193 = vld [vmem:[#allocation6 + $0xc0] sm:$0xff]
    %v2194 = vld [vmem:[#allocation6 + $0xc8] sm:$0xff]
    %v2195 = vld [vmem:[#allocation6 + $0xd0] sm:$0xff]
    %v2196 = vld [vmem:[#allocation6 + $0xd8] sm:$0x1]
    %v2197 = vlaneseq
    %v2198 = vshrl.u32 %v2197, 7
    %v2199 = vsub.s32 0, %v2198
    %v2200 = vrot.slane %v2196, %v2199
    %2202 = vrot.lane.b32.xlu0 %v2191, 32
    %v2203 = vpop.permute.xlu0 %2202
    %v2204 = vsel %vm110, %v2203, 0
    %2206 = vmatprep.subr.mxu0 0.0
    %2207 = vmatpush1.msra.mxu0 0.0
    %2208 = vmatprep.subr.mxu0 0.0
    %2209 = vmatpush1.msra.mxu0 0.0
    %2210 = vmatprep.subr.mxu0 0.0
    %2211 = vmatpush1.msra.mxu0 0.0
    %2212 = vmatprep.subr.mxu0 0.0
    %2213 = vmatpush1.msra.mxu0 0.0
    %2214 = vmatprep.subr.mxu0 0.0
    %2215 = vmatpush1.msra.mxu0 0.0
    %2216 = vmatprep.subr.mxu0 0.0
    %2217 = vmatpush1.msra.mxu0 0.0
    %2218 = vmatprep.subr.mxu0 0.0
    %2219 = vmatpush1.msra.mxu0 0.0
    %2220 = vmatprep.subr.mxu0 0.0
    %2221 = vmatpush1.msra.mxu0 0.0
    %2222 = vmatprep.subr.mxu0 0.0
    %2223 = vmatpush1.msra.mxu0 0.0
    %2224 = vmatprep.subr.mxu0 0.0
    %2225 = vmatpush1.msra.mxu0 0.0
    %2226 = vmatprep.subr.mxu0 0.0
    %2227 = vmatpush1.msra.mxu0 0.0
    %2228 = vmatprep.subr.mxu0 0.0
    %2229 = vmatpush1.msra.mxu0 0.0
    %2230 = vmatprep.subr.mxu0 0.0
    %2231 = vmatpush1.msra.mxu0 %v2195
    %2232 = vmatprep.subr.mxu0 0.0
    %2233 = vmatpush1.msra.mxu0 %v2194
    %2234 = vmatprep.subr.mxu0 0.0
    %2235 = vmatpush1.msra.mxu0 %v2193
    %2236 = vmatprep.subr.mxu0 0.0
    %2237 = vmatpush1.msra.mxu0 %v2192
    %2238 = vmatprep.subr.mxu0 0.0
    %2239 = vmatpush2.msra.mxu0 0.0
    %2240 = vmatprep.subr.mxu0 0.0
    %2241 = vmatpush2.msra.mxu0 0.0
    %2242 = vmatprep.subr.mxu0 0.0
    %2243 = vmatpush2.msra.mxu0 0.0
    %2244 = vmatprep.subr.mxu0 0.0
    %2245 = vmatpush2.msra.mxu0 0.0
    %2246 = vmatprep.subr.mxu0 0.0
    %2247 = vmatpush2.msra.mxu0 0.0
    %2248 = vmatprep.subr.mxu0 0.0
    %2249 = vmatpush2.msra.mxu0 0.0
    %2250 = vmatprep.subr.mxu0 0.0
    %2251 = vmatpush2.msra.mxu0 0.0
    %2252 = vmatprep.subr.mxu0 0.0
    %2253 = vmatpush2.msra.mxu0 0.0
    %2254 = vmatprep.subr.mxu0 0.0
    %2255 = vmatpush2.msra.mxu0 0.0
    %2256 = vmatprep.subr.mxu0 0.0
    %2257 = vmatpush2.msra.mxu0 0.0
    %2258 = vmatprep.subr.mxu0 0.0
    %2259 = vmatpush2.msra.mxu0 0.0
    %2260 = vmatprep.subr.mxu0 0.0
    %2261 = vmatpush2.msra.mxu0 0.0
    %2262 = vmatprep.subr.mxu0 0.0
    %2263 = vmatpush2.msra.mxu0 0.0
    %2264 = vmatprep.subr.mxu0 0.0
    %2265 = vmatpush2.msra.mxu0 0.0
    %2266 = vmatprep.subr.mxu0 0.0
    %2267 = vmatpush2.msra.mxu0 0.0
    %2268 = vmatprep.subr.mxu0 0.0
    %2269 = vmatpush2.msra.mxu0 0.0
    %2270 = vmatprep.mubr.f32.mxu0 0.0
    %2271 = vmatmul.mubr.f32.gmra.mxu0 %v2204
    %v2272 = vpop.f32.mrf.mxu0
    %v2273 = vadd.f32 %v2200, %v2272
    %v2274 = vpop.f32.mrf.mxu0
    %2275 = vdwg.mxu0
    %vm2276 = vcmask 123904
    %2277 = vst.msk [vmem:[#allocation7] sm:$0x3] %vm2276, %v2273
    // Predicated region
    $region18: #{model_forward.1} parent=1 // pred_check
      _
    $region19: #{model_forward.1} parent=1 // pred_check_branch
      %2279 = sbr.rel (0) target = $region21
    $region20: #{model_forward.1} parent=1 // pred_region
      %s2281 = ssub.s32 32, 32
      %2282 = vsyncadd [#allocation4], %s2281
      %s2284 = sshll.u32 [#allocation7], 4
      %s2285 = int_to_ptr.vmem [resolvable:$true] %s2284
      %2287 = dma.vmem_to_hbm [thread:$0]  %s2285, 32, %s2, [#allocation4]
    $region21: #{model_forward.1} parent=1 // pred_fallthru
      _
    // Predicated region
    $region22: #{model_forward.1} parent=1 // pred_check
      _
    $region23: #{model_forward.1} parent=1 // pred_check_branch
      %2289 = sbr.rel (0) target = $region25
    $region24: #{model_forward.1} parent=1 // pred_region
      %2290 = dma.done [#allocation4], 32
    $region25: #{model_forward.1} parent=1 // pred_fallthru
      _
    %2291 = vsyncpa [#allocation3], 1
    %2292 = vsyncpa [#allocation4], 1
    %2293 = vsyncpa [#allocation5], 1

</llo_original>
